<compile_context>
chip_gen: v7x
topology: tpu7x:2x2x1
jax: 0.10.0
libtpu: 0.0.40
codegen_flags: <defaults>
</compile_context>

<pallas_src>
import functools

import jax
import jax.numpy as jnp
import numpy as np
from jax import lax
from jax.experimental import pallas as pl
from jax.experimental.pallas import tpu as pltpu

_LANES = 128
_SUBLANES = 8


# ----------------------------------------------------------------------------
# Per-chunk loss math on cell-dense (rows, 128) channel slabs.
# ----------------------------------------------------------------------------
def _chunk_loss(p_ref, t_ref, r0, rows, l_coord, l_noobj):
    """Loss contributions of `rows * 128` cells.

    p_ref / t_ref: (30, rows_per_tile, 128) channel-major, cell-dense VMEM refs.
    Returns an (rows, 128) f32 array; summing it over all cells gives N * loss.
    """
    f32 = jnp.float32

    def ld(ref, c):
        # Static channel view, dynamic (8-aligned) sublane window, full lanes.
        return ref.at[c][pl.ds(r0, rows), :].astype(f32)

    P = [ld(p_ref, c) for c in range(10)]     # predicted box channels 0..9
    T = [ld(t_ref, c) for c in range(10)]     # target box channels 0..9

    t_conf = T[4]
    coo = t_conf > 0.0                        # cells containing an object
    noo = t_conf == 0.0                       # cells with no object
    coo_f = coo.astype(f32)
    noo_f = noo.astype(f32)

    def xyxy(x, y, w, h):
        cx = x * (1.0 / 14.0)
        cy = y * (1.0 / 14.0)
        hw = 0.5 * w
        hh = 0.5 * h
        return cx - hw, cy - hh, cx + hw, cy + hh

    ax1, ay1, ax2, ay2 = xyxy(P[0], P[1], P[2], P[3])   # predicted box A
    bx1, by1, bx2, by2 = xyxy(P[5], P[6], P[7], P[8])   # predicted box B
    tx1, ty1, tx2, ty2 = xyxy(T[0], T[1], T[2], T[3])   # (first) target box
    area_t = T[2] * T[3]

    def iou(x1, y1, x2, y2, area_p):
        iw = jnp.maximum(jnp.minimum(x2, tx2) - jnp.maximum(x1, tx1), 0.0)
        ih = jnp.maximum(jnp.minimum(y2, ty2) - jnp.maximum(y1, ty1), 0.0)
        inter = iw * ih
        # Exact divide kept (not approx reciprocal) to hold 1e-4 tolerance.
        denom = jnp.where(coo, area_p + area_t - inter, 1.0)   # NaN-safe in noo cells
        return inter / denom

    iou_a = iou(ax1, ay1, ax2, ay2, P[2] * P[3])
    iou_b = iou(bx1, by1, bx2, by2, P[7] * P[8])
    resp_a = iou_a >= iou_b                   # box A responsible (first box wins ties)
    max_iou = jnp.maximum(iou_a, iou_b)

    sel = lambda ca, cb: jnp.where(resp_a, ca, cb)
    pr_x, pr_y = sel(P[0], P[5]), sel(P[1], P[6])
    pr_w, pr_h = sel(P[2], P[7]), sel(P[3], P[8])
    pr_c = sel(P[4], P[9])                    # responsible predicted confidence
    pn_c = sel(P[9], P[4])                    # non-responsible predicted confidence
    tr_x, tr_y = sel(T[0], T[5]), sel(T[1], T[6])
    tr_w, tr_h = sel(T[2], T[7]), sel(T[3], T[8])

    contain = (pr_c - max_iou) ** 2
    not_contain = pn_c * pn_c
    # EUP sqrt, NaN-safe for no-object cells (matches torch.sqrt on coo cells only).
    ssqrt = lambda v: jnp.sqrt(jnp.where(coo, v, 1.0))
    loc = ((pr_x - tr_x) ** 2 + (pr_y - tr_y) ** 2
           + (ssqrt(pr_w) - ssqrt(tr_w)) ** 2
           + (ssqrt(pr_h) - ssqrt(tr_h)) ** 2)

    # no-object confidence loss (channels 4 and 9)
    d4 = P[4] - T[4]
    d9 = P[9] - T[9]
    noobj = d4 * d4 + d9 * d9

    # class loss over channels 10..29 -- streamed loads keep vreg pressure low
    class_sum = jnp.zeros_like(coo_f)
    for c in range(10, 30):
        d = ld(p_ref, c) - ld(t_ref, c)
        class_sum = class_sum + d * d

    return (coo_f * (l_coord * loc + 2.0 * contain + not_contain + class_sum)
            + l_noobj * noo_f * noobj)


# ----------------------------------------------------------------------------
# Kernel: 2-D grid (core_split, tiles); output block is the resident accumulator.
# ----------------------------------------------------------------------------
def _yolo_loss_kernel(p_ref, t_ref, out_ref, *, l_coord, l_noobj, n_chunks, rows):
    """p_ref/t_ref: (30, n_chunks*rows, 128) blocks; out_ref: (1, rows, 128)."""
    @pl.when(pl.program_id(1) == 0)
    def _init():
        out_ref[...] = jnp.zeros_like(out_ref)

    if n_chunks == 1:
        total = _chunk_loss(p_ref, t_ref, 0, rows, l_coord, l_noobj)
    else:
        def chunk_body(j, carry):
            r0 = pl.multiple_of(j * rows, rows)
            return carry + _chunk_loss(p_ref, t_ref, r0, rows, l_coord, l_noobj)

        total = lax.fori_loop(0, n_chunks, chunk_body,
                              jnp.zeros((rows, _LANES), jnp.float32), unroll=True)

    # One vreg-sized read-modify-write per grid step (not per chunk).
    out_ref[...] += total[None, :, :]


# ----------------------------------------------------------------------------
# Wrapper
# ----------------------------------------------------------------------------
def yolo_loss_pallas(pred, target, *, l_coord=5.0, l_noobj=0.5,
                     cells_per_chunk=1024, chunks_per_tile=8, core_splits=2):
    """pred, target: (N, S, S, 30) -> scalar f32 loss (YOLO-v1, B=2, 20 classes)."""
    N, S, S2, C = pred.shape
    assert S == S2 and C == 30
    assert cells_per_chunk % _LANES == 0
    rows = cells_per_chunk // _LANES
    assert rows % _SUBLANES == 0

    M = N * S * S
    n_chunks_total = -(-M // cells_per_chunk)
    cpt = max(1, min(chunks_per_tile, n_chunks_total))          # chunks per grid step
    n_tiles = -(-n_chunks_total // cpt)
    n_tiles = core_splits * (-(-n_tiles // core_splits))        # even split across cores
    Mp = n_tiles * cpt * cells_per_chunk

    p = pred.reshape(M, C)
    t = target.reshape(M, C)
    if Mp > M:
        # Padded cells have pred == target == 0: t_conf == 0 -> no-object cell with
        # d4 = d9 = 0, so every loss term is exactly 0 for padding.
        p = jnp.pad(p, ((0, Mp - M), (0, 0)))
        t = jnp.pad(t, ((0, Mp - M), (0, 0)))

    # Single host-side re-layout to channel-major, cell-dense (30, Mp//128, 128);
    # native dtype is kept and upcast to f32 only after the block load.
    p = p.T.reshape(C, Mp // _LANES, _LANES)
    t = t.T.reshape(C, Mp // _LANES, _LANES)

    rows_per_tile = cpt * rows
    half = n_tiles // core_splits

    kernel = functools.partial(
        _yolo_loss_kernel, l_coord=float(l_coord), l_noobj=float(l_noobj),
        n_chunks=cpt, rows=rows)

    in_spec = pl.BlockSpec((C, rows_per_tile, _LANES),
                           lambda c, i: (0, c * half + i, 0))

    out = pl.pallas_call(
        kernel,
        out_shape=jax.ShapeDtypeStruct((core_splits, rows, _LANES), jnp.float32),
        grid_spec=pltpu.PrefetchScalarGridSpec(
            num_scalar_prefetch=0,
            grid=(core_splits, half),
            in_specs=[in_spec, in_spec],
            out_specs=pl.BlockSpec((1, rows, _LANES), lambda c, i: (c, 0, 0)),
        ),
        compiler_params=pltpu.CompilerParams(
            dimension_semantics=("parallel", "arbitrary")),
    )(p, t)

    # Final cross-lane reduction of the tiny per-core partials + 1/N scale.
    return jnp.sum(out) * (1.0 / float(N))


# ----------------------------------------------------------------------------
# NumPy reference that mirrors the PyTorch forward literally (loop over cells).
# ----------------------------------------------------------------------------
def yolo_loss_reference(pred, target, l_coord=5.0, l_noobj=0.5):
    pred = np.asarray(pred, np.float64)
    target = np.asarray(target, np.float64)
    N = pred.shape[0]
    coo = target[..., 4] > 0
    noo = target[..., 4] == 0
    coo_pred, coo_targ = pred[coo], target[coo]
    noo_pred, noo_targ = pred[noo], target[noo]
    noobj = np.sum((noo_pred[:, [4, 9]] - noo_targ[:, [4, 9]]) ** 2)
    box_pred = coo_pred[:, :10].reshape(-1, 5)
    box_targ = coo_targ[:, :10].reshape(-1, 5)
    class_loss = np.sum((coo_pred[:, 10:] - coo_targ[:, 10:]) ** 2)
    loc = contain = not_contain = 0.0
    for i in range(0, box_targ.shape[0], 2):
        b1 = box_pred[i:i + 2]
        b1xy = np.concatenate([b1[:, :2] / 14.0 - 0.5 * b1[:, 2:4],
                               b1[:, :2] / 14.0 + 0.5 * b1[:, 2:4]], axis=1)
        b2 = box_targ[i:i + 1]
        b2xy = np.concatenate([b2[:, :2] / 14.0 - 0.5 * b2[:, 2:4],
                               b2[:, :2] / 14.0 + 0.5 * b2[:, 2:4]], axis=1)
        lt = np.maximum(b1xy[:, None, :2], b2xy[None, :, :2])
        rb = np.minimum(b1xy[:, None, 2:], b2xy[None, :, 2:])
        wh = np.clip(rb - lt, 0.0, None)
        inter = wh[..., 0] * wh[..., 1]
        a1 = ((b1xy[:, 2] - b1xy[:, 0]) * (b1xy[:, 3] - b1xy[:, 1]))[:, None]
        a2 = ((b2xy[:, 2] - b2xy[:, 0]) * (b2xy[:, 3] - b2xy[:, 1]))[None, :]
        iou = inter / (a1 + a2 - inter)
        idx = int(np.argmax(iou[:, 0]))
        max_iou = iou[idx, 0]
        pr, tr, pn = box_pred[i + idx], box_targ[i + idx], box_pred[i + 1 - idx]
        contain += (pr[4] - max_iou) ** 2
        loc += np.sum((pr[:2] - tr[:2]) ** 2) + np.sum(
            (np.sqrt(pr[2:4]) - np.sqrt(tr[2:4])) ** 2)
        not_contain += pn[4] ** 2
    return (l_coord * loc + 2 * contain + not_contain + l_noobj * noobj + class_loss) / N


if __name__ == "__main__":
    key = jax.random.PRNGKey(0)
    k1, k2, k3, k4, k5, k6 = jax.random.split(key, 6)
    S, C = 14, 30   # S=14 matches the hard-coded /14.0 in the module

    # Case 1: small batch (M = 392 cells -> one real tile, one all-padding tile).
    N1 = 2
    pred1 = jax.random.uniform(k1, (N1, S, S, C), jnp.float32, minval=0.05, maxval=0.95)
    target1 = jax.random.uniform(k2, (N1, S, S, C), jnp.float32, minval=0.05, maxval=0.95)
    obj1 = (jax.random.uniform(k3, (N1, S, S)) > 0.7).astype(jnp.float32)
    target1 = target1.at[..., 4].set(obj1)   # objectness: 1 for coo cells, 0 for noo

    ref1 = yolo_loss_reference(pred1, target1, 5.0, 0.5)
    loss1 = jax.block_until_ready(
        yolo_loss_pallas(pred1, target1, l_coord=5.0, l_noobj=0.5))
    np.testing.assert_allclose(float(loss1), float(ref1), rtol=1e-4, atol=1e-4)

    # Case 2: larger batch with one chunk per grid step -> exercises the
    # cross-step output-block accumulator and both halves of the core split.
    N2 = 16
    pred2 = jax.random.uniform(k4, (N2, S, S, C), jnp.float32, minval=0.05, maxval=0.95)
    target2 = jax.random.uniform(k5, (N2, S, S, C), jnp.float32, minval=0.05, maxval=0.95)
    obj2 = (jax.random.uniform(k6, (N2, S, S)) > 0.7).astype(jnp.float32)
    target2 = target2.at[..., 4].set(obj2)

    ref2 = yolo_loss_reference(pred2, target2, 5.0, 0.5)
    loss2 = jax.block_until_ready(
        yolo_loss_pallas(pred2, target2, l_coord=5.0, l_noobj=0.5, chunks_per_tile=1))
    np.testing.assert_allclose(float(loss2), float(ref2), rtol=1e-4, atol=1e-4)

    print("KERNEL_OK")
</pallas_src>

<mosaic_0001>
module attributes {stable_mosaic.version = 11 : i64} {
  func.func @_yolo_loss_kernel(%arg0: i32, %arg1: i32, %arg2: memref<30x8x128xf32, #tpu.memory_space<vmem>>, %arg3: memref<30x8x128xf32, #tpu.memory_space<vmem>>, %arg4: memref<1x8x128xf32, #tpu.memory_space<vmem>>) attributes {dimension_semantics = [#tpu.dimension_semantics<parallel>, #tpu.dimension_semantics<arbitrary>], iteration_bounds = array<i64: 2, 1>, scalar_prefetch = 0 : i64, scratch_operands = 0 : i64, tpu.core_type = #tpu.core_type<tc>, window_params = [{transform_indices = @transform_0, window_bounds = array<i64: 30, 8, 128>}, {transform_indices = @transform_1, window_bounds = array<i64: 30, 8, 128>}, {transform_indices = @transform_2, window_bounds = array<i64: 1, 8, 128>}]} {
    %c0_i32 = arith.constant 0 : i32
    %0 = arith.cmpi eq, %arg1, %c0_i32 : i32
    %1 = arith.extui %0 : i1 to i32
    %c0_i32_0 = arith.constant 0 : i32
    %2 = arith.cmpi ne, %1, %c0_i32_0 : i32
    scf.if %2 {
      %cst_304 = arith.constant 0.000000e+00 : f32
      %382 = vector.broadcast %cst_304 : f32 to vector<1x8x128xf32>
      %c0_305 = arith.constant 0 : index
      %c0_306 = arith.constant 0 : index
      %c0_307 = arith.constant 0 : index
      %383 = vector.load %arg4[%c0_305, %c0_306, %c0_307] : memref<1x8x128xf32, #tpu.memory_space<vmem>>, vector<1x8x128xf32>
      tpu.vector_store %arg4[%c0_305, %c0_306, %c0_307], %382 {strides = array<i32>} : memref<1x8x128xf32, #tpu.memory_space<vmem>>, vector<1x8x128xf32>,
    } else {
    }
    %c0_i32_1 = arith.constant 0 : i32
    %c0_i32_2 = arith.constant 0 : i32
    %c0_i32_3 = arith.constant 0 : i32
    %3 = tpu.memref_slice %arg2[%c0_i32_1, %c0_i32_2, %c0_i32_3] : memref<30x8x128xf32, #tpu.memory_space<vmem>> -> memref<1x8x128xf32, #tpu.memory_space<vmem>>
    %4 = tpu.memref_squeeze %3 : memref<1x8x128xf32, #tpu.memory_space<vmem>> -> memref<8x128xf32, #tpu.memory_space<vmem>>
    %c0 = arith.constant 0 : index
    %c0_4 = arith.constant 0 : index
    %5 = vector.load %4[%c0, %c0_4] : memref<8x128xf32, #tpu.memory_space<vmem>>, vector<8x128xf32>
    %c1_i32 = arith.constant 1 : i32
    %c0_i32_5 = arith.constant 0 : i32
    %c0_i32_6 = arith.constant 0 : i32
    %6 = tpu.memref_slice %arg2[%c1_i32, %c0_i32_5, %c0_i32_6] : memref<30x8x128xf32, #tpu.memory_space<vmem>> -> memref<1x8x128xf32, #tpu.memory_space<vmem>>
    %7 = tpu.memref_squeeze %6 : memref<1x8x128xf32, #tpu.memory_space<vmem>> -> memref<8x128xf32, #tpu.memory_space<vmem>>
    %c0_7 = arith.constant 0 : index
    %c0_8 = arith.constant 0 : index
    %8 = vector.load %7[%c0_7, %c0_8] : memref<8x128xf32, #tpu.memory_space<vmem>>, vector<8x128xf32>
    %c2_i32 = arith.constant 2 : i32
    %c0_i32_9 = arith.constant 0 : i32
    %c0_i32_10 = arith.constant 0 : i32
    %9 = tpu.memref_slice %arg2[%c2_i32, %c0_i32_9, %c0_i32_10] : memref<30x8x128xf32, #tpu.memory_space<vmem>> -> memref<1x8x128xf32, #tpu.memory_space<vmem>>
    %10 = tpu.memref_squeeze %9 : memref<1x8x128xf32, #tpu.memory_space<vmem>> -> memref<8x128xf32, #tpu.memory_space<vmem>>
    %c0_11 = arith.constant 0 : index
    %c0_12 = arith.constant 0 : index
    %11 = vector.load %10[%c0_11, %c0_12] : memref<8x128xf32, #tpu.memory_space<vmem>>, vector<8x128xf32>
    %c3_i32 = arith.constant 3 : i32
    %c0_i32_13 = arith.constant 0 : i32
    %c0_i32_14 = arith.constant 0 : i32
    %12 = tpu.memref_slice %arg2[%c3_i32, %c0_i32_13, %c0_i32_14] : memref<30x8x128xf32, #tpu.memory_space<vmem>> -> memref<1x8x128xf32, #tpu.memory_space<vmem>>
    %13 = tpu.memref_squeeze %12 : memref<1x8x128xf32, #tpu.memory_space<vmem>> -> memref<8x128xf32, #tpu.memory_space<vmem>>
    %c0_15 = arith.constant 0 : index
    %c0_16 = arith.constant 0 : index
    %14 = vector.load %13[%c0_15, %c0_16] : memref<8x128xf32, #tpu.memory_space<vmem>>, vector<8x128xf32>
    %c4_i32 = arith.constant 4 : i32
    %c0_i32_17 = arith.constant 0 : i32
    %c0_i32_18 = arith.constant 0 : i32
    %15 = tpu.memref_slice %arg2[%c4_i32, %c0_i32_17, %c0_i32_18] : memref<30x8x128xf32, #tpu.memory_space<vmem>> -> memref<1x8x128xf32, #tpu.memory_space<vmem>>
    %16 = tpu.memref_squeeze %15 : memref<1x8x128xf32, #tpu.memory_space<vmem>> -> memref<8x128xf32, #tpu.memory_space<vmem>>
    %c0_19 = arith.constant 0 : index
    %c0_20 = arith.constant 0 : index
    %17 = vector.load %16[%c0_19, %c0_20] : memref<8x128xf32, #tpu.memory_space<vmem>>, vector<8x128xf32>
    %c5_i32 = arith.constant 5 : i32
    %c0_i32_21 = arith.constant 0 : i32
    %c0_i32_22 = arith.constant 0 : i32
    %18 = tpu.memref_slice %arg2[%c5_i32, %c0_i32_21, %c0_i32_22] : memref<30x8x128xf32, #tpu.memory_space<vmem>> -> memref<1x8x128xf32, #tpu.memory_space<vmem>>
    %19 = tpu.memref_squeeze %18 : memref<1x8x128xf32, #tpu.memory_space<vmem>> -> memref<8x128xf32, #tpu.memory_space<vmem>>
    %c0_23 = arith.constant 0 : index
    %c0_24 = arith.constant 0 : index
    %20 = vector.load %19[%c0_23, %c0_24] : memref<8x128xf32, #tpu.memory_space<vmem>>, vector<8x128xf32>
    %c6_i32 = arith.constant 6 : i32
    %c0_i32_25 = arith.constant 0 : i32
    %c0_i32_26 = arith.constant 0 : i32
    %21 = tpu.memref_slice %arg2[%c6_i32, %c0_i32_25, %c0_i32_26] : memref<30x8x128xf32, #tpu.memory_space<vmem>> -> memref<1x8x128xf32, #tpu.memory_space<vmem>>
    %22 = tpu.memref_squeeze %21 : memref<1x8x128xf32, #tpu.memory_space<vmem>> -> memref<8x128xf32, #tpu.memory_space<vmem>>
    %c0_27 = arith.constant 0 : index
    %c0_28 = arith.constant 0 : index
    %23 = vector.load %22[%c0_27, %c0_28] : memref<8x128xf32, #tpu.memory_space<vmem>>, vector<8x128xf32>
    %c7_i32 = arith.constant 7 : i32
    %c0_i32_29 = arith.constant 0 : i32
    %c0_i32_30 = arith.constant 0 : i32
    %24 = tpu.memref_slice %arg2[%c7_i32, %c0_i32_29, %c0_i32_30] : memref<30x8x128xf32, #tpu.memory_space<vmem>> -> memref<1x8x128xf32, #tpu.memory_space<vmem>>
    %25 = tpu.memref_squeeze %24 : memref<1x8x128xf32, #tpu.memory_space<vmem>> -> memref<8x128xf32, #tpu.memory_space<vmem>>
    %c0_31 = arith.constant 0 : index
    %c0_32 = arith.constant 0 : index
    %26 = vector.load %25[%c0_31, %c0_32] : memref<8x128xf32, #tpu.memory_space<vmem>>, vector<8x128xf32>
    %c8_i32 = arith.constant 8 : i32
    %c0_i32_33 = arith.constant 0 : i32
    %c0_i32_34 = arith.constant 0 : i32
    %27 = tpu.memref_slice %arg2[%c8_i32, %c0_i32_33, %c0_i32_34] : memref<30x8x128xf32, #tpu.memory_space<vmem>> -> memref<1x8x128xf32, #tpu.memory_space<vmem>>
    %28 = tpu.memref_squeeze %27 : memref<1x8x128xf32, #tpu.memory_space<vmem>> -> memref<8x128xf32, #tpu.memory_space<vmem>>
    %c0_35 = arith.constant 0 : index
    %c0_36 = arith.constant 0 : index
    %29 = vector.load %28[%c0_35, %c0_36] : memref<8x128xf32, #tpu.memory_space<vmem>>, vector<8x128xf32>
    %c9_i32 = arith.constant 9 : i32
    %c0_i32_37 = arith.constant 0 : i32
    %c0_i32_38 = arith.constant 0 : i32
    %30 = tpu.memref_slice %arg2[%c9_i32, %c0_i32_37, %c0_i32_38] : memref<30x8x128xf32, #tpu.memory_space<vmem>> -> memref<1x8x128xf32, #tpu.memory_space<vmem>>
    %31 = tpu.memref_squeeze %30 : memref<1x8x128xf32, #tpu.memory_space<vmem>> -> memref<8x128xf32, #tpu.memory_space<vmem>>
    %c0_39 = arith.constant 0 : index
    %c0_40 = arith.constant 0 : index
    %32 = vector.load %31[%c0_39, %c0_40] : memref<8x128xf32, #tpu.memory_space<vmem>>, vector<8x128xf32>
    %c0_i32_41 = arith.constant 0 : i32
    %c0_i32_42 = arith.constant 0 : i32
    %c0_i32_43 = arith.constant 0 : i32
    %33 = tpu.memref_slice %arg3[%c0_i32_41, %c0_i32_42, %c0_i32_43] : memref<30x8x128xf32, #tpu.memory_space<vmem>> -> memref<1x8x128xf32, #tpu.memory_space<vmem>>
    %34 = tpu.memref_squeeze %33 : memref<1x8x128xf32, #tpu.memory_space<vmem>> -> memref<8x128xf32, #tpu.memory_space<vmem>>
    %c0_44 = arith.constant 0 : index
    %c0_45 = arith.constant 0 : index
    %35 = vector.load %34[%c0_44, %c0_45] : memref<8x128xf32, #tpu.memory_space<vmem>>, vector<8x128xf32>
    %c1_i32_46 = arith.constant 1 : i32
    %c0_i32_47 = arith.constant 0 : i32
    %c0_i32_48 = arith.constant 0 : i32
    %36 = tpu.memref_slice %arg3[%c1_i32_46, %c0_i32_47, %c0_i32_48] : memref<30x8x128xf32, #tpu.memory_space<vmem>> -> memref<1x8x128xf32, #tpu.memory_space<vmem>>
    %37 = tpu.memref_squeeze %36 : memref<1x8x128xf32, #tpu.memory_space<vmem>> -> memref<8x128xf32, #tpu.memory_space<vmem>>
    %c0_49 = arith.constant 0 : index
    %c0_50 = arith.constant 0 : index
    %38 = vector.load %37[%c0_49, %c0_50] : memref<8x128xf32, #tpu.memory_space<vmem>>, vector<8x128xf32>
    %c2_i32_51 = arith.constant 2 : i32
    %c0_i32_52 = arith.constant 0 : i32
    %c0_i32_53 = arith.constant 0 : i32
    %39 = tpu.memref_slice %arg3[%c2_i32_51, %c0_i32_52, %c0_i32_53] : memref<30x8x128xf32, #tpu.memory_space<vmem>> -> memref<1x8x128xf32, #tpu.memory_space<vmem>>
    %40 = tpu.memref_squeeze %39 : memref<1x8x128xf32, #tpu.memory_space<vmem>> -> memref<8x128xf32, #tpu.memory_space<vmem>>
    %c0_54 = arith.constant 0 : index
    %c0_55 = arith.constant 0 : index
    %41 = vector.load %40[%c0_54, %c0_55] : memref<8x128xf32, #tpu.memory_space<vmem>>, vector<8x128xf32>
    %c3_i32_56 = arith.constant 3 : i32
    %c0_i32_57 = arith.constant 0 : i32
    %c0_i32_58 = arith.constant 0 : i32
    %42 = tpu.memref_slice %arg3[%c3_i32_56, %c0_i32_57, %c0_i32_58] : memref<30x8x128xf32, #tpu.memory_space<vmem>> -> memref<1x8x128xf32, #tpu.memory_space<vmem>>
    %43 = tpu.memref_squeeze %42 : memref<1x8x128xf32, #tpu.memory_space<vmem>> -> memref<8x128xf32, #tpu.memory_space<vmem>>
    %c0_59 = arith.constant 0 : index
    %c0_60 = arith.constant 0 : index
    %44 = vector.load %43[%c0_59, %c0_60] : memref<8x128xf32, #tpu.memory_space<vmem>>, vector<8x128xf32>
    %c4_i32_61 = arith.constant 4 : i32
    %c0_i32_62 = arith.constant 0 : i32
    %c0_i32_63 = arith.constant 0 : i32
    %45 = tpu.memref_slice %arg3[%c4_i32_61, %c0_i32_62, %c0_i32_63] : memref<30x8x128xf32, #tpu.memory_space<vmem>> -> memref<1x8x128xf32, #tpu.memory_space<vmem>>
    %46 = tpu.memref_squeeze %45 : memref<1x8x128xf32, #tpu.memory_space<vmem>> -> memref<8x128xf32, #tpu.memory_space<vmem>>
    %c0_64 = arith.constant 0 : index
    %c0_65 = arith.constant 0 : index
    %47 = vector.load %46[%c0_64, %c0_65] : memref<8x128xf32, #tpu.memory_space<vmem>>, vector<8x128xf32>
    %c5_i32_66 = arith.constant 5 : i32
    %c0_i32_67 = arith.constant 0 : i32
    %c0_i32_68 = arith.constant 0 : i32
    %48 = tpu.memref_slice %arg3[%c5_i32_66, %c0_i32_67, %c0_i32_68] : memref<30x8x128xf32, #tpu.memory_space<vmem>> -> memref<1x8x128xf32, #tpu.memory_space<vmem>>
    %49 = tpu.memref_squeeze %48 : memref<1x8x128xf32, #tpu.memory_space<vmem>> -> memref<8x128xf32, #tpu.memory_space<vmem>>
    %c0_69 = arith.constant 0 : index
    %c0_70 = arith.constant 0 : index
    %50 = vector.load %49[%c0_69, %c0_70] : memref<8x128xf32, #tpu.memory_space<vmem>>, vector<8x128xf32>
    %c6_i32_71 = arith.constant 6 : i32
    %c0_i32_72 = arith.constant 0 : i32
    %c0_i32_73 = arith.constant 0 : i32
    %51 = tpu.memref_slice %arg3[%c6_i32_71, %c0_i32_72, %c0_i32_73] : memref<30x8x128xf32, #tpu.memory_space<vmem>> -> memref<1x8x128xf32, #tpu.memory_space<vmem>>
    %52 = tpu.memref_squeeze %51 : memref<1x8x128xf32, #tpu.memory_space<vmem>> -> memref<8x128xf32, #tpu.memory_space<vmem>>
    %c0_74 = arith.constant 0 : index
    %c0_75 = arith.constant 0 : index
    %53 = vector.load %52[%c0_74, %c0_75] : memref<8x128xf32, #tpu.memory_space<vmem>>, vector<8x128xf32>
    %c7_i32_76 = arith.constant 7 : i32
    %c0_i32_77 = arith.constant 0 : i32
    %c0_i32_78 = arith.constant 0 : i32
    %54 = tpu.memref_slice %arg3[%c7_i32_76, %c0_i32_77, %c0_i32_78] : memref<30x8x128xf32, #tpu.memory_space<vmem>> -> memref<1x8x128xf32, #tpu.memory_space<vmem>>
    %55 = tpu.memref_squeeze %54 : memref<1x8x128xf32, #tpu.memory_space<vmem>> -> memref<8x128xf32, #tpu.memory_space<vmem>>
    %c0_79 = arith.constant 0 : index
    %c0_80 = arith.constant 0 : index
    %56 = vector.load %55[%c0_79, %c0_80] : memref<8x128xf32, #tpu.memory_space<vmem>>, vector<8x128xf32>
    %c8_i32_81 = arith.constant 8 : i32
    %c0_i32_82 = arith.constant 0 : i32
    %c0_i32_83 = arith.constant 0 : i32
    %57 = tpu.memref_slice %arg3[%c8_i32_81, %c0_i32_82, %c0_i32_83] : memref<30x8x128xf32, #tpu.memory_space<vmem>> -> memref<1x8x128xf32, #tpu.memory_space<vmem>>
    %58 = tpu.memref_squeeze %57 : memref<1x8x128xf32, #tpu.memory_space<vmem>> -> memref<8x128xf32, #tpu.memory_space<vmem>>
    %c0_84 = arith.constant 0 : index
    %c0_85 = arith.constant 0 : index
    %59 = vector.load %58[%c0_84, %c0_85] : memref<8x128xf32, #tpu.memory_space<vmem>>, vector<8x128xf32>
    %c9_i32_86 = arith.constant 9 : i32
    %c0_i32_87 = arith.constant 0 : i32
    %c0_i32_88 = arith.constant 0 : i32
    %60 = tpu.memref_slice %arg3[%c9_i32_86, %c0_i32_87, %c0_i32_88] : memref<30x8x128xf32, #tpu.memory_space<vmem>> -> memref<1x8x128xf32, #tpu.memory_space<vmem>>
    %61 = tpu.memref_squeeze %60 : memref<1x8x128xf32, #tpu.memory_space<vmem>> -> memref<8x128xf32, #tpu.memory_space<vmem>>
    %c0_89 = arith.constant 0 : index
    %c0_90 = arith.constant 0 : index
    %62 = vector.load %61[%c0_89, %c0_90] : memref<8x128xf32, #tpu.memory_space<vmem>>, vector<8x128xf32>
    %cst = arith.constant 0.000000e+00 : f32
    %63 = vector.broadcast %cst : f32 to vector<8x128xf32>
    %64 = arith.cmpf ogt, %47, %63 : vector<8x128xf32>
    %cst_91 = arith.constant 0.000000e+00 : f32
    %65 = vector.broadcast %cst_91 : f32 to vector<8x128xf32>
    %66 = arith.cmpf oeq, %47, %65 : vector<8x128xf32>
    %67 = arith.extui %64 : vector<8x128xi1> to vector<8x128xi32>
    %68 = arith.sitofp %67 : vector<8x128xi32> to vector<8x128xf32>
    %69 = arith.extui %66 : vector<8x128xi1> to vector<8x128xi32>
    %70 = arith.sitofp %69 : vector<8x128xi32> to vector<8x128xf32>
    %cst_92 = arith.constant 0.0714285746 : f32
    %71 = vector.broadcast %cst_92 : f32 to vector<8x128xf32>
    %72 = arith.mulf %5, %71 : vector<8x128xf32>
    %cst_93 = arith.constant 0.0714285746 : f32
    %73 = vector.broadcast %cst_93 : f32 to vector<8x128xf32>
    %74 = arith.mulf %8, %73 : vector<8x128xf32>
    %cst_94 = arith.constant 5.000000e-01 : f32
    %75 = vector.broadcast %cst_94 : f32 to vector<8x128xf32>
    %76 = arith.mulf %75, %11 : vector<8x128xf32>
    %cst_95 = arith.constant 5.000000e-01 : f32
    %77 = vector.broadcast %cst_95 : f32 to vector<8x128xf32>
    %78 = arith.mulf %77, %14 : vector<8x128xf32>
    %79 = arith.subf %72, %76 : vector<8x128xf32>
    %80 = arith.subf %74, %78 : vector<8x128xf32>
    %81 = arith.addf %72, %76 : vector<8x128xf32>
    %82 = arith.addf %74, %78 : vector<8x128xf32>
    %cst_96 = arith.constant 0.0714285746 : f32
    %83 = vector.broadcast %cst_96 : f32 to vector<8x128xf32>
    %84 = arith.mulf %20, %83 : vector<8x128xf32>
    %cst_97 = arith.constant 0.0714285746 : f32
    %85 = vector.broadcast %cst_97 : f32 to vector<8x128xf32>
    %86 = arith.mulf %23, %85 : vector<8x128xf32>
    %cst_98 = arith.constant 5.000000e-01 : f32
    %87 = vector.broadcast %cst_98 : f32 to vector<8x128xf32>
    %88 = arith.mulf %87, %26 : vector<8x128xf32>
    %cst_99 = arith.constant 5.000000e-01 : f32
    %89 = vector.broadcast %cst_99 : f32 to vector<8x128xf32>
    %90 = arith.mulf %89, %29 : vector<8x128xf32>
    %91 = arith.subf %84, %88 : vector<8x128xf32>
    %92 = arith.subf %86, %90 : vector<8x128xf32>
    %93 = arith.addf %84, %88 : vector<8x128xf32>
    %94 = arith.addf %86, %90 : vector<8x128xf32>
    %cst_100 = arith.constant 0.0714285746 : f32
    %95 = vector.broadcast %cst_100 : f32 to vector<8x128xf32>
    %96 = arith.mulf %35, %95 : vector<8x128xf32>
    %cst_101 = arith.constant 0.0714285746 : f32
    %97 = vector.broadcast %cst_101 : f32 to vector<8x128xf32>
    %98 = arith.mulf %38, %97 : vector<8x128xf32>
    %cst_102 = arith.constant 5.000000e-01 : f32
    %99 = vector.broadcast %cst_102 : f32 to vector<8x128xf32>
    %100 = arith.mulf %99, %41 : vector<8x128xf32>
    %cst_103 = arith.constant 5.000000e-01 : f32
    %101 = vector.broadcast %cst_103 : f32 to vector<8x128xf32>
    %102 = arith.mulf %101, %44 : vector<8x128xf32>
    %103 = arith.subf %96, %100 : vector<8x128xf32>
    %104 = arith.subf %98, %102 : vector<8x128xf32>
    %105 = arith.addf %96, %100 : vector<8x128xf32>
    %106 = arith.addf %98, %102 : vector<8x128xf32>
    %107 = arith.mulf %41, %44 : vector<8x128xf32>
    %108 = arith.mulf %11, %14 : vector<8x128xf32>
    %109 = arith.minimumf %81, %105 : vector<8x128xf32>
    %110 = arith.maximumf %79, %103 : vector<8x128xf32>
    %111 = arith.subf %109, %110 : vector<8x128xf32>
    %cst_104 = arith.constant 0.000000e+00 : f32
    %112 = vector.broadcast %cst_104 : f32 to vector<8x128xf32>
    %113 = arith.maximumf %111, %112 : vector<8x128xf32>
    %114 = arith.minimumf %82, %106 : vector<8x128xf32>
    %115 = arith.maximumf %80, %104 : vector<8x128xf32>
    %116 = arith.subf %114, %115 : vector<8x128xf32>
    %cst_105 = arith.constant 0.000000e+00 : f32
    %117 = vector.broadcast %cst_105 : f32 to vector<8x128xf32>
    %118 = arith.maximumf %116, %117 : vector<8x128xf32>
    %119 = arith.mulf %113, %118 : vector<8x128xf32>
    %120 = arith.addf %108, %107 : vector<8x128xf32>
    %121 = arith.subf %120, %119 : vector<8x128xf32>
    %cst_106 = arith.constant 1.000000e+00 : f32
    %122 = vector.broadcast %cst_106 : f32 to vector<8x128xf32>
    %123 = arith.select %64, %121, %122 : vector<8x128xi1>, vector<8x128xf32>
    %124 = arith.divf %119, %123 : vector<8x128xf32>
    %125 = arith.mulf %26, %29 : vector<8x128xf32>
    %126 = arith.minimumf %93, %105 : vector<8x128xf32>
    %127 = arith.maximumf %91, %103 : vector<8x128xf32>
    %128 = arith.subf %126, %127 : vector<8x128xf32>
    %cst_107 = arith.constant 0.000000e+00 : f32
    %129 = vector.broadcast %cst_107 : f32 to vector<8x128xf32>
    %130 = arith.maximumf %128, %129 : vector<8x128xf32>
    %131 = arith.minimumf %94, %106 : vector<8x128xf32>
    %132 = arith.maximumf %92, %104 : vector<8x128xf32>
    %133 = arith.subf %131, %132 : vector<8x128xf32>
    %cst_108 = arith.constant 0.000000e+00 : f32
    %134 = vector.broadcast %cst_108 : f32 to vector<8x128xf32>
    %135 = arith.maximumf %133, %134 : vector<8x128xf32>
    %136 = arith.mulf %130, %135 : vector<8x128xf32>
    %137 = arith.addf %125, %107 : vector<8x128xf32>
    %138 = arith.subf %137, %136 : vector<8x128xf32>
    %cst_109 = arith.constant 1.000000e+00 : f32
    %139 = vector.broadcast %cst_109 : f32 to vector<8x128xf32>
    %140 = arith.select %64, %138, %139 : vector<8x128xi1>, vector<8x128xf32>
    %141 = arith.divf %136, %140 : vector<8x128xf32>
    %142 = arith.cmpf oge, %124, %141 : vector<8x128xf32>
    %143 = arith.maximumf %124, %141 : vector<8x128xf32>
    %144 = arith.select %142, %5, %20 : vector<8x128xi1>, vector<8x128xf32>
    %145 = arith.select %142, %8, %23 : vector<8x128xi1>, vector<8x128xf32>
    %146 = arith.select %142, %11, %26 : vector<8x128xi1>, vector<8x128xf32>
    %147 = arith.select %142, %14, %29 : vector<8x128xi1>, vector<8x128xf32>
    %148 = arith.select %142, %17, %32 : vector<8x128xi1>, vector<8x128xf32>
    %149 = arith.select %142, %32, %17 : vector<8x128xi1>, vector<8x128xf32>
    %150 = arith.select %142, %35, %50 : vector<8x128xi1>, vector<8x128xf32>
    %151 = arith.select %142, %38, %53 : vector<8x128xi1>, vector<8x128xf32>
    %152 = arith.select %142, %41, %56 : vector<8x128xi1>, vector<8x128xf32>
    %153 = arith.select %142, %44, %59 : vector<8x128xi1>, vector<8x128xf32>
    %154 = arith.subf %148, %143 : vector<8x128xf32>
    %155 = arith.mulf %154, %154 : vector<8x128xf32>
    %156 = arith.mulf %149, %149 : vector<8x128xf32>
    %157 = arith.subf %144, %150 : vector<8x128xf32>
    %158 = arith.mulf %157, %157 : vector<8x128xf32>
    %159 = arith.subf %145, %151 : vector<8x128xf32>
    %160 = arith.mulf %159, %159 : vector<8x128xf32>
    %161 = arith.addf %158, %160 : vector<8x128xf32>
    %cst_110 = arith.constant 1.000000e+00 : f32
    %162 = vector.broadcast %cst_110 : f32 to vector<8x128xf32>
    %163 = arith.select %64, %146, %162 : vector<8x128xi1>, vector<8x128xf32>
    %164 = math.sqrt %163 : vector<8x128xf32>
    %cst_111 = arith.constant 1.000000e+00 : f32
    %165 = vector.broadcast %cst_111 : f32 to vector<8x128xf32>
    %166 = arith.select %64, %152, %165 : vector<8x128xi1>, vector<8x128xf32>
    %167 = math.sqrt %166 : vector<8x128xf32>
    %168 = arith.subf %164, %167 : vector<8x128xf32>
    %169 = arith.mulf %168, %168 : vector<8x128xf32>
    %170 = arith.addf %161, %169 : vector<8x128xf32>
    %cst_112 = arith.constant 1.000000e+00 : f32
    %171 = vector.broadcast %cst_112 : f32 to vector<8x128xf32>
    %172 = arith.select %64, %147, %171 : vector<8x128xi1>, vector<8x128xf32>
    %173 = math.sqrt %172 : vector<8x128xf32>
    %cst_113 = arith.constant 1.000000e+00 : f32
    %174 = vector.broadcast %cst_113 : f32 to vector<8x128xf32>
    %175 = arith.select %64, %153, %174 : vector<8x128xi1>, vector<8x128xf32>
    %176 = math.sqrt %175 : vector<8x128xf32>
    %177 = arith.subf %173, %176 : vector<8x128xf32>
    %178 = arith.mulf %177, %177 : vector<8x128xf32>
    %179 = arith.addf %170, %178 : vector<8x128xf32>
    %180 = arith.subf %17, %47 : vector<8x128xf32>
    %181 = arith.subf %32, %62 : vector<8x128xf32>
    %182 = arith.mulf %180, %180 : vector<8x128xf32>
    %183 = arith.mulf %181, %181 : vector<8x128xf32>
    %184 = arith.addf %182, %183 : vector<8x128xf32>
    %cst_114 = arith.constant 0.000000e+00 : f32
    %185 = vector.broadcast %cst_114 : f32 to vector<8x128xf32>
    %c10_i32 = arith.constant 10 : i32
    %c0_i32_115 = arith.constant 0 : i32
    %c0_i32_116 = arith.constant 0 : i32
    %186 = tpu.memref_slice %arg2[%c10_i32, %c0_i32_115, %c0_i32_116] : memref<30x8x128xf32, #tpu.memory_space<vmem>> -> memref<1x8x128xf32, #tpu.memory_space<vmem>>
    %187 = tpu.memref_squeeze %186 : memref<1x8x128xf32, #tpu.memory_space<vmem>> -> memref<8x128xf32, #tpu.memory_space<vmem>>
    %c0_117 = arith.constant 0 : index
    %c0_118 = arith.constant 0 : index
    %188 = vector.load %187[%c0_117, %c0_118] : memref<8x128xf32, #tpu.memory_space<vmem>>, vector<8x128xf32>
    %c10_i32_119 = arith.constant 10 : i32
    %c0_i32_120 = arith.constant 0 : i32
    %c0_i32_121 = arith.constant 0 : i32
    %189 = tpu.memref_slice %arg3[%c10_i32_119, %c0_i32_120, %c0_i32_121] : memref<30x8x128xf32, #tpu.memory_space<vmem>> -> memref<1x8x128xf32, #tpu.memory_space<vmem>>
    %190 = tpu.memref_squeeze %189 : memref<1x8x128xf32, #tpu.memory_space<vmem>> -> memref<8x128xf32, #tpu.memory_space<vmem>>
    %c0_122 = arith.constant 0 : index
    %c0_123 = arith.constant 0 : index
    %191 = vector.load %190[%c0_122, %c0_123] : memref<8x128xf32, #tpu.memory_space<vmem>>, vector<8x128xf32>
    %192 = arith.subf %188, %191 : vector<8x128xf32>
    %193 = arith.mulf %192, %192 : vector<8x128xf32>
    %194 = arith.addf %185, %193 : vector<8x128xf32>
    %c11_i32 = arith.constant 11 : i32
    %c0_i32_124 = arith.constant 0 : i32
    %c0_i32_125 = arith.constant 0 : i32
    %195 = tpu.memref_slice %arg2[%c11_i32, %c0_i32_124, %c0_i32_125] : memref<30x8x128xf32, #tpu.memory_space<vmem>> -> memref<1x8x128xf32, #tpu.memory_space<vmem>>
    %196 = tpu.memref_squeeze %195 : memref<1x8x128xf32, #tpu.memory_space<vmem>> -> memref<8x128xf32, #tpu.memory_space<vmem>>
    %c0_126 = arith.constant 0 : index
    %c0_127 = arith.constant 0 : index
    %197 = vector.load %196[%c0_126, %c0_127] : memref<8x128xf32, #tpu.memory_space<vmem>>, vector<8x128xf32>
    %c11_i32_128 = arith.constant 11 : i32
    %c0_i32_129 = arith.constant 0 : i32
    %c0_i32_130 = arith.constant 0 : i32
    %198 = tpu.memref_slice %arg3[%c11_i32_128, %c0_i32_129, %c0_i32_130] : memref<30x8x128xf32, #tpu.memory_space<vmem>> -> memref<1x8x128xf32, #tpu.memory_space<vmem>>
    %199 = tpu.memref_squeeze %198 : memref<1x8x128xf32, #tpu.memory_space<vmem>> -> memref<8x128xf32, #tpu.memory_space<vmem>>
    %c0_131 = arith.constant 0 : index
    %c0_132 = arith.constant 0 : index
    %200 = vector.load %199[%c0_131, %c0_132] : memref<8x128xf32, #tpu.memory_space<vmem>>, vector<8x128xf32>
    %201 = arith.subf %197, %200 : vector<8x128xf32>
    %202 = arith.mulf %201, %201 : vector<8x128xf32>
    %203 = arith.addf %194, %202 : vector<8x128xf32>
    %c12_i32 = arith.constant 12 : i32
    %c0_i32_133 = arith.constant 0 : i32
    %c0_i32_134 = arith.constant 0 : i32
    %204 = tpu.memref_slice %arg2[%c12_i32, %c0_i32_133, %c0_i32_134] : memref<30x8x128xf32, #tpu.memory_space<vmem>> -> memref<1x8x128xf32, #tpu.memory_space<vmem>>
    %205 = tpu.memref_squeeze %204 : memref<1x8x128xf32, #tpu.memory_space<vmem>> -> memref<8x128xf32, #tpu.memory_space<vmem>>
    %c0_135 = arith.constant 0 : index
    %c0_136 = arith.constant 0 : index
    %206 = vector.load %205[%c0_135, %c0_136] : memref<8x128xf32, #tpu.memory_space<vmem>>, vector<8x128xf32>
    %c12_i32_137 = arith.constant 12 : i32
    %c0_i32_138 = arith.constant 0 : i32
    %c0_i32_139 = arith.constant 0 : i32
    %207 = tpu.memref_slice %arg3[%c12_i32_137, %c0_i32_138, %c0_i32_139] : memref<30x8x128xf32, #tpu.memory_space<vmem>> -> memref<1x8x128xf32, #tpu.memory_space<vmem>>
    %208 = tpu.memref_squeeze %207 : memref<1x8x128xf32, #tpu.memory_space<vmem>> -> memref<8x128xf32, #tpu.memory_space<vmem>>
    %c0_140 = arith.constant 0 : index
    %c0_141 = arith.constant 0 : index
    %209 = vector.load %208[%c0_140, %c0_141] : memref<8x128xf32, #tpu.memory_space<vmem>>, vector<8x128xf32>
    %210 = arith.subf %206, %209 : vector<8x128xf32>
    %211 = arith.mulf %210, %210 : vector<8x128xf32>
    %212 = arith.addf %203, %211 : vector<8x128xf32>
    %c13_i32 = arith.constant 13 : i32
    %c0_i32_142 = arith.constant 0 : i32
    %c0_i32_143 = arith.constant 0 : i32
    %213 = tpu.memref_slice %arg2[%c13_i32, %c0_i32_142, %c0_i32_143] : memref<30x8x128xf32, #tpu.memory_space<vmem>> -> memref<1x8x128xf32, #tpu.memory_space<vmem>>
    %214 = tpu.memref_squeeze %213 : memref<1x8x128xf32, #tpu.memory_space<vmem>> -> memref<8x128xf32, #tpu.memory_space<vmem>>
    %c0_144 = arith.constant 0 : index
    %c0_145 = arith.constant 0 : index
    %215 = vector.load %214[%c0_144, %c0_145] : memref<8x128xf32, #tpu.memory_space<vmem>>, vector<8x128xf32>
    %c13_i32_146 = arith.constant 13 : i32
    %c0_i32_147 = arith.constant 0 : i32
    %c0_i32_148 = arith.constant 0 : i32
    %216 = tpu.memref_slice %arg3[%c13_i32_146, %c0_i32_147, %c0_i32_148] : memref<30x8x128xf32, #tpu.memory_space<vmem>> -> memref<1x8x128xf32, #tpu.memory_space<vmem>>
    %217 = tpu.memref_squeeze %216 : memref<1x8x128xf32, #tpu.memory_space<vmem>> -> memref<8x128xf32, #tpu.memory_space<vmem>>
    %c0_149 = arith.constant 0 : index
    %c0_150 = arith.constant 0 : index
    %218 = vector.load %217[%c0_149, %c0_150] : memref<8x128xf32, #tpu.memory_space<vmem>>, vector<8x128xf32>
    %219 = arith.subf %215, %218 : vector<8x128xf32>
    %220 = arith.mulf %219, %219 : vector<8x128xf32>
    %221 = arith.addf %212, %220 : vector<8x128xf32>
    %c14_i32 = arith.constant 14 : i32
    %c0_i32_151 = arith.constant 0 : i32
    %c0_i32_152 = arith.constant 0 : i32
    %222 = tpu.memref_slice %arg2[%c14_i32, %c0_i32_151, %c0_i32_152] : memref<30x8x128xf32, #tpu.memory_space<vmem>> -> memref<1x8x128xf32, #tpu.memory_space<vmem>>
    %223 = tpu.memref_squeeze %222 : memref<1x8x128xf32, #tpu.memory_space<vmem>> -> memref<8x128xf32, #tpu.memory_space<vmem>>
    %c0_153 = arith.constant 0 : index
    %c0_154 = arith.constant 0 : index
    %224 = vector.load %223[%c0_153, %c0_154] : memref<8x128xf32, #tpu.memory_space<vmem>>, vector<8x128xf32>
    %c14_i32_155 = arith.constant 14 : i32
    %c0_i32_156 = arith.constant 0 : i32
    %c0_i32_157 = arith.constant 0 : i32
    %225 = tpu.memref_slice %arg3[%c14_i32_155, %c0_i32_156, %c0_i32_157] : memref<30x8x128xf32, #tpu.memory_space<vmem>> -> memref<1x8x128xf32, #tpu.memory_space<vmem>>
    %226 = tpu.memref_squeeze %225 : memref<1x8x128xf32, #tpu.memory_space<vmem>> -> memref<8x128xf32, #tpu.memory_space<vmem>>
    %c0_158 = arith.constant 0 : index
    %c0_159 = arith.constant 0 : index
    %227 = vector.load %226[%c0_158, %c0_159] : memref<8x128xf32, #tpu.memory_space<vmem>>, vector<8x128xf32>
    %228 = arith.subf %224, %227 : vector<8x128xf32>
    %229 = arith.mulf %228, %228 : vector<8x128xf32>
    %230 = arith.addf %221, %229 : vector<8x128xf32>
    %c15_i32 = arith.constant 15 : i32
    %c0_i32_160 = arith.constant 0 : i32
    %c0_i32_161 = arith.constant 0 : i32
    %231 = tpu.memref_slice %arg2[%c15_i32, %c0_i32_160, %c0_i32_161] : memref<30x8x128xf32, #tpu.memory_space<vmem>> -> memref<1x8x128xf32, #tpu.memory_space<vmem>>
    %232 = tpu.memref_squeeze %231 : memref<1x8x128xf32, #tpu.memory_space<vmem>> -> memref<8x128xf32, #tpu.memory_space<vmem>>
    %c0_162 = arith.constant 0 : index
    %c0_163 = arith.constant 0 : index
    %233 = vector.load %232[%c0_162, %c0_163] : memref<8x128xf32, #tpu.memory_space<vmem>>, vector<8x128xf32>
    %c15_i32_164 = arith.constant 15 : i32
    %c0_i32_165 = arith.constant 0 : i32
    %c0_i32_166 = arith.constant 0 : i32
    %234 = tpu.memref_slice %arg3[%c15_i32_164, %c0_i32_165, %c0_i32_166] : memref<30x8x128xf32, #tpu.memory_space<vmem>> -> memref<1x8x128xf32, #tpu.memory_space<vmem>>
    %235 = tpu.memref_squeeze %234 : memref<1x8x128xf32, #tpu.memory_space<vmem>> -> memref<8x128xf32, #tpu.memory_space<vmem>>
    %c0_167 = arith.constant 0 : index
    %c0_168 = arith.constant 0 : index
    %236 = vector.load %235[%c0_167, %c0_168] : memref<8x128xf32, #tpu.memory_space<vmem>>, vector<8x128xf32>
    %237 = arith.subf %233, %236 : vector<8x128xf32>
    %238 = arith.mulf %237, %237 : vector<8x128xf32>
    %239 = arith.addf %230, %238 : vector<8x128xf32>
    %c16_i32 = arith.constant 16 : i32
    %c0_i32_169 = arith.constant 0 : i32
    %c0_i32_170 = arith.constant 0 : i32
    %240 = tpu.memref_slice %arg2[%c16_i32, %c0_i32_169, %c0_i32_170] : memref<30x8x128xf32, #tpu.memory_space<vmem>> -> memref<1x8x128xf32, #tpu.memory_space<vmem>>
    %241 = tpu.memref_squeeze %240 : memref<1x8x128xf32, #tpu.memory_space<vmem>> -> memref<8x128xf32, #tpu.memory_space<vmem>>
    %c0_171 = arith.constant 0 : index
    %c0_172 = arith.constant 0 : index
    %242 = vector.load %241[%c0_171, %c0_172] : memref<8x128xf32, #tpu.memory_space<vmem>>, vector<8x128xf32>
    %c16_i32_173 = arith.constant 16 : i32
    %c0_i32_174 = arith.constant 0 : i32
    %c0_i32_175 = arith.constant 0 : i32
    %243 = tpu.memref_slice %arg3[%c16_i32_173, %c0_i32_174, %c0_i32_175] : memref<30x8x128xf32, #tpu.memory_space<vmem>> -> memref<1x8x128xf32, #tpu.memory_space<vmem>>
    %244 = tpu.memref_squeeze %243 : memref<1x8x128xf32, #tpu.memory_space<vmem>> -> memref<8x128xf32, #tpu.memory_space<vmem>>
    %c0_176 = arith.constant 0 : index
    %c0_177 = arith.constant 0 : index
    %245 = vector.load %244[%c0_176, %c0_177] : memref<8x128xf32, #tpu.memory_space<vmem>>, vector<8x128xf32>
    %246 = arith.subf %242, %245 : vector<8x128xf32>
    %247 = arith.mulf %246, %246 : vector<8x128xf32>
    %248 = arith.addf %239, %247 : vector<8x128xf32>
    %c17_i32 = arith.constant 17 : i32
    %c0_i32_178 = arith.constant 0 : i32
    %c0_i32_179 = arith.constant 0 : i32
    %249 = tpu.memref_slice %arg2[%c17_i32, %c0_i32_178, %c0_i32_179] : memref<30x8x128xf32, #tpu.memory_space<vmem>> -> memref<1x8x128xf32, #tpu.memory_space<vmem>>
    %250 = tpu.memref_squeeze %249 : memref<1x8x128xf32, #tpu.memory_space<vmem>> -> memref<8x128xf32, #tpu.memory_space<vmem>>
    %c0_180 = arith.constant 0 : index
    %c0_181 = arith.constant 0 : index
    %251 = vector.load %250[%c0_180, %c0_181] : memref<8x128xf32, #tpu.memory_space<vmem>>, vector<8x128xf32>
    %c17_i32_182 = arith.constant 17 : i32
    %c0_i32_183 = arith.constant 0 : i32
    %c0_i32_184 = arith.constant 0 : i32
    %252 = tpu.memref_slice %arg3[%c17_i32_182, %c0_i32_183, %c0_i32_184] : memref<30x8x128xf32, #tpu.memory_space<vmem>> -> memref<1x8x128xf32, #tpu.memory_space<vmem>>
    %253 = tpu.memref_squeeze %252 : memref<1x8x128xf32, #tpu.memory_space<vmem>> -> memref<8x128xf32, #tpu.memory_space<vmem>>
    %c0_185 = arith.constant 0 : index
    %c0_186 = arith.constant 0 : index
    %254 = vector.load %253[%c0_185, %c0_186] : memref<8x128xf32, #tpu.memory_space<vmem>>, vector<8x128xf32>
    %255 = arith.subf %251, %254 : vector<8x128xf32>
    %256 = arith.mulf %255, %255 : vector<8x128xf32>
    %257 = arith.addf %248, %256 : vector<8x128xf32>
    %c18_i32 = arith.constant 18 : i32
    %c0_i32_187 = arith.constant 0 : i32
    %c0_i32_188 = arith.constant 0 : i32
    %258 = tpu.memref_slice %arg2[%c18_i32, %c0_i32_187, %c0_i32_188] : memref<30x8x128xf32, #tpu.memory_space<vmem>> -> memref<1x8x128xf32, #tpu.memory_space<vmem>>
    %259 = tpu.memref_squeeze %258 : memref<1x8x128xf32, #tpu.memory_space<vmem>> -> memref<8x128xf32, #tpu.memory_space<vmem>>
    %c0_189 = arith.constant 0 : index
    %c0_190 = arith.constant 0 : index
    %260 = vector.load %259[%c0_189, %c0_190] : memref<8x128xf32, #tpu.memory_space<vmem>>, vector<8x128xf32>
    %c18_i32_191 = arith.constant 18 : i32
    %c0_i32_192 = arith.constant 0 : i32
    %c0_i32_193 = arith.constant 0 : i32
    %261 = tpu.memref_slice %arg3[%c18_i32_191, %c0_i32_192, %c0_i32_193] : memref<30x8x128xf32, #tpu.memory_space<vmem>> -> memref<1x8x128xf32, #tpu.memory_space<vmem>>
    %262 = tpu.memref_squeeze %261 : memref<1x8x128xf32, #tpu.memory_space<vmem>> -> memref<8x128xf32, #tpu.memory_space<vmem>>
    %c0_194 = arith.constant 0 : index
    %c0_195 = arith.constant 0 : index
    %263 = vector.load %262[%c0_194, %c0_195] : memref<8x128xf32, #tpu.memory_space<vmem>>, vector<8x128xf32>
    %264 = arith.subf %260, %263 : vector<8x128xf32>
    %265 = arith.mulf %264, %264 : vector<8x128xf32>
    %266 = arith.addf %257, %265 : vector<8x128xf32>
    %c19_i32 = arith.constant 19 : i32
    %c0_i32_196 = arith.constant 0 : i32
    %c0_i32_197 = arith.constant 0 : i32
    %267 = tpu.memref_slice %arg2[%c19_i32, %c0_i32_196, %c0_i32_197] : memref<30x8x128xf32, #tpu.memory_space<vmem>> -> memref<1x8x128xf32, #tpu.memory_space<vmem>>
    %268 = tpu.memref_squeeze %267 : memref<1x8x128xf32, #tpu.memory_space<vmem>> -> memref<8x128xf32, #tpu.memory_space<vmem>>
    %c0_198 = arith.constant 0 : index
    %c0_199 = arith.constant 0 : index
    %269 = vector.load %268[%c0_198, %c0_199] : memref<8x128xf32, #tpu.memory_space<vmem>>, vector<8x128xf32>
    %c19_i32_200 = arith.constant 19 : i32
    %c0_i32_201 = arith.constant 0 : i32
    %c0_i32_202 = arith.constant 0 : i32
    %270 = tpu.memref_slice %arg3[%c19_i32_200, %c0_i32_201, %c0_i32_202] : memref<30x8x128xf32, #tpu.memory_space<vmem>> -> memref<1x8x128xf32, #tpu.memory_space<vmem>>
    %271 = tpu.memref_squeeze %270 : memref<1x8x128xf32, #tpu.memory_space<vmem>> -> memref<8x128xf32, #tpu.memory_space<vmem>>
    %c0_203 = arith.constant 0 : index
    %c0_204 = arith.constant 0 : index
    %272 = vector.load %271[%c0_203, %c0_204] : memref<8x128xf32, #tpu.memory_space<vmem>>, vector<8x128xf32>
    %273 = arith.subf %269, %272 : vector<8x128xf32>
    %274 = arith.mulf %273, %273 : vector<8x128xf32>
    %275 = arith.addf %266, %274 : vector<8x128xf32>
    %c20_i32 = arith.constant 20 : i32
    %c0_i32_205 = arith.constant 0 : i32
    %c0_i32_206 = arith.constant 0 : i32
    %276 = tpu.memref_slice %arg2[%c20_i32, %c0_i32_205, %c0_i32_206] : memref<30x8x128xf32, #tpu.memory_space<vmem>> -> memref<1x8x128xf32, #tpu.memory_space<vmem>>
    %277 = tpu.memref_squeeze %276 : memref<1x8x128xf32, #tpu.memory_space<vmem>> -> memref<8x128xf32, #tpu.memory_space<vmem>>
    %c0_207 = arith.constant 0 : index
    %c0_208 = arith.constant 0 : index
    %278 = vector.load %277[%c0_207, %c0_208] : memref<8x128xf32, #tpu.memory_space<vmem>>, vector<8x128xf32>
    %c20_i32_209 = arith.constant 20 : i32
    %c0_i32_210 = arith.constant 0 : i32
    %c0_i32_211 = arith.constant 0 : i32
    %279 = tpu.memref_slice %arg3[%c20_i32_209, %c0_i32_210, %c0_i32_211] : memref<30x8x128xf32, #tpu.memory_space<vmem>> -> memref<1x8x128xf32, #tpu.memory_space<vmem>>
    %280 = tpu.memref_squeeze %279 : memref<1x8x128xf32, #tpu.memory_space<vmem>> -> memref<8x128xf32, #tpu.memory_space<vmem>>
    %c0_212 = arith.constant 0 : index
    %c0_213 = arith.constant 0 : index
    %281 = vector.load %280[%c0_212, %c0_213] : memref<8x128xf32, #tpu.memory_space<vmem>>, vector<8x128xf32>
    %282 = arith.subf %278, %281 : vector<8x128xf32>
    %283 = arith.mulf %282, %282 : vector<8x128xf32>
    %284 = arith.addf %275, %283 : vector<8x128xf32>
    %c21_i32 = arith.constant 21 : i32
    %c0_i32_214 = arith.constant 0 : i32
    %c0_i32_215 = arith.constant 0 : i32
    %285 = tpu.memref_slice %arg2[%c21_i32, %c0_i32_214, %c0_i32_215] : memref<30x8x128xf32, #tpu.memory_space<vmem>> -> memref<1x8x128xf32, #tpu.memory_space<vmem>>
    %286 = tpu.memref_squeeze %285 : memref<1x8x128xf32, #tpu.memory_space<vmem>> -> memref<8x128xf32, #tpu.memory_space<vmem>>
    %c0_216 = arith.constant 0 : index
    %c0_217 = arith.constant 0 : index
    %287 = vector.load %286[%c0_216, %c0_217] : memref<8x128xf32, #tpu.memory_space<vmem>>, vector<8x128xf32>
    %c21_i32_218 = arith.constant 21 : i32
    %c0_i32_219 = arith.constant 0 : i32
    %c0_i32_220 = arith.constant 0 : i32
    %288 = tpu.memref_slice %arg3[%c21_i32_218, %c0_i32_219, %c0_i32_220] : memref<30x8x128xf32, #tpu.memory_space<vmem>> -> memref<1x8x128xf32, #tpu.memory_space<vmem>>
    %289 = tpu.memref_squeeze %288 : memref<1x8x128xf32, #tpu.memory_space<vmem>> -> memref<8x128xf32, #tpu.memory_space<vmem>>
    %c0_221 = arith.constant 0 : index
    %c0_222 = arith.constant 0 : index
    %290 = vector.load %289[%c0_221, %c0_222] : memref<8x128xf32, #tpu.memory_space<vmem>>, vector<8x128xf32>
    %291 = arith.subf %287, %290 : vector<8x128xf32>
    %292 = arith.mulf %291, %291 : vector<8x128xf32>
    %293 = arith.addf %284, %292 : vector<8x128xf32>
    %c22_i32 = arith.constant 22 : i32
    %c0_i32_223 = arith.constant 0 : i32
    %c0_i32_224 = arith.constant 0 : i32
    %294 = tpu.memref_slice %arg2[%c22_i32, %c0_i32_223, %c0_i32_224] : memref<30x8x128xf32, #tpu.memory_space<vmem>> -> memref<1x8x128xf32, #tpu.memory_space<vmem>>
    %295 = tpu.memref_squeeze %294 : memref<1x8x128xf32, #tpu.memory_space<vmem>> -> memref<8x128xf32, #tpu.memory_space<vmem>>
    %c0_225 = arith.constant 0 : index
    %c0_226 = arith.constant 0 : index
    %296 = vector.load %295[%c0_225, %c0_226] : memref<8x128xf32, #tpu.memory_space<vmem>>, vector<8x128xf32>
    %c22_i32_227 = arith.constant 22 : i32
    %c0_i32_228 = arith.constant 0 : i32
    %c0_i32_229 = arith.constant 0 : i32
    %297 = tpu.memref_slice %arg3[%c22_i32_227, %c0_i32_228, %c0_i32_229] : memref<30x8x128xf32, #tpu.memory_space<vmem>> -> memref<1x8x128xf32, #tpu.memory_space<vmem>>
    %298 = tpu.memref_squeeze %297 : memref<1x8x128xf32, #tpu.memory_space<vmem>> -> memref<8x128xf32, #tpu.memory_space<vmem>>
    %c0_230 = arith.constant 0 : index
    %c0_231 = arith.constant 0 : index
    %299 = vector.load %298[%c0_230, %c0_231] : memref<8x128xf32, #tpu.memory_space<vmem>>, vector<8x128xf32>
    %300 = arith.subf %296, %299 : vector<8x128xf32>
    %301 = arith.mulf %300, %300 : vector<8x128xf32>
    %302 = arith.addf %293, %301 : vector<8x128xf32>
    %c23_i32 = arith.constant 23 : i32
    %c0_i32_232 = arith.constant 0 : i32
    %c0_i32_233 = arith.constant 0 : i32
    %303 = tpu.memref_slice %arg2[%c23_i32, %c0_i32_232, %c0_i32_233] : memref<30x8x128xf32, #tpu.memory_space<vmem>> -> memref<1x8x128xf32, #tpu.memory_space<vmem>>
    %304 = tpu.memref_squeeze %303 : memref<1x8x128xf32, #tpu.memory_space<vmem>> -> memref<8x128xf32, #tpu.memory_space<vmem>>
    %c0_234 = arith.constant 0 : index
    %c0_235 = arith.constant 0 : index
    %305 = vector.load %304[%c0_234, %c0_235] : memref<8x128xf32, #tpu.memory_space<vmem>>, vector<8x128xf32>
    %c23_i32_236 = arith.constant 23 : i32
    %c0_i32_237 = arith.constant 0 : i32
    %c0_i32_238 = arith.constant 0 : i32
    %306 = tpu.memref_slice %arg3[%c23_i32_236, %c0_i32_237, %c0_i32_238] : memref<30x8x128xf32, #tpu.memory_space<vmem>> -> memref<1x8x128xf32, #tpu.memory_space<vmem>>
    %307 = tpu.memref_squeeze %306 : memref<1x8x128xf32, #tpu.memory_space<vmem>> -> memref<8x128xf32, #tpu.memory_space<vmem>>
    %c0_239 = arith.constant 0 : index
    %c0_240 = arith.constant 0 : index
    %308 = vector.load %307[%c0_239, %c0_240] : memref<8x128xf32, #tpu.memory_space<vmem>>, vector<8x128xf32>
    %309 = arith.subf %305, %308 : vector<8x128xf32>
    %310 = arith.mulf %309, %309 : vector<8x128xf32>
    %311 = arith.addf %302, %310 : vector<8x128xf32>
    %c24_i32 = arith.constant 24 : i32
    %c0_i32_241 = arith.constant 0 : i32
    %c0_i32_242 = arith.constant 0 : i32
    %312 = tpu.memref_slice %arg2[%c24_i32, %c0_i32_241, %c0_i32_242] : memref<30x8x128xf32, #tpu.memory_space<vmem>> -> memref<1x8x128xf32, #tpu.memory_space<vmem>>
    %313 = tpu.memref_squeeze %312 : memref<1x8x128xf32, #tpu.memory_space<vmem>> -> memref<8x128xf32, #tpu.memory_space<vmem>>
    %c0_243 = arith.constant 0 : index
    %c0_244 = arith.constant 0 : index
    %314 = vector.load %313[%c0_243, %c0_244] : memref<8x128xf32, #tpu.memory_space<vmem>>, vector<8x128xf32>
    %c24_i32_245 = arith.constant 24 : i32
    %c0_i32_246 = arith.constant 0 : i32
    %c0_i32_247 = arith.constant 0 : i32
    %315 = tpu.memref_slice %arg3[%c24_i32_245, %c0_i32_246, %c0_i32_247] : memref<30x8x128xf32, #tpu.memory_space<vmem>> -> memref<1x8x128xf32, #tpu.memory_space<vmem>>
    %316 = tpu.memref_squeeze %315 : memref<1x8x128xf32, #tpu.memory_space<vmem>> -> memref<8x128xf32, #tpu.memory_space<vmem>>
    %c0_248 = arith.constant 0 : index
    %c0_249 = arith.constant 0 : index
    %317 = vector.load %316[%c0_248, %c0_249] : memref<8x128xf32, #tpu.memory_space<vmem>>, vector<8x128xf32>
    %318 = arith.subf %314, %317 : vector<8x128xf32>
    %319 = arith.mulf %318, %318 : vector<8x128xf32>
    %320 = arith.addf %311, %319 : vector<8x128xf32>
    %c25_i32 = arith.constant 25 : i32
    %c0_i32_250 = arith.constant 0 : i32
    %c0_i32_251 = arith.constant 0 : i32
    %321 = tpu.memref_slice %arg2[%c25_i32, %c0_i32_250, %c0_i32_251] : memref<30x8x128xf32, #tpu.memory_space<vmem>> -> memref<1x8x128xf32, #tpu.memory_space<vmem>>
    %322 = tpu.memref_squeeze %321 : memref<1x8x128xf32, #tpu.memory_space<vmem>> -> memref<8x128xf32, #tpu.memory_space<vmem>>
    %c0_252 = arith.constant 0 : index
    %c0_253 = arith.constant 0 : index
    %323 = vector.load %322[%c0_252, %c0_253] : memref<8x128xf32, #tpu.memory_space<vmem>>, vector<8x128xf32>
    %c25_i32_254 = arith.constant 25 : i32
    %c0_i32_255 = arith.constant 0 : i32
    %c0_i32_256 = arith.constant 0 : i32
    %324 = tpu.memref_slice %arg3[%c25_i32_254, %c0_i32_255, %c0_i32_256] : memref<30x8x128xf32, #tpu.memory_space<vmem>> -> memref<1x8x128xf32, #tpu.memory_space<vmem>>
    %325 = tpu.memref_squeeze %324 : memref<1x8x128xf32, #tpu.memory_space<vmem>> -> memref<8x128xf32, #tpu.memory_space<vmem>>
    %c0_257 = arith.constant 0 : index
    %c0_258 = arith.constant 0 : index
    %326 = vector.load %325[%c0_257, %c0_258] : memref<8x128xf32, #tpu.memory_space<vmem>>, vector<8x128xf32>
    %327 = arith.subf %323, %326 : vector<8x128xf32>
    %328 = arith.mulf %327, %327 : vector<8x128xf32>
    %329 = arith.addf %320, %328 : vector<8x128xf32>
    %c26_i32 = arith.constant 26 : i32
    %c0_i32_259 = arith.constant 0 : i32
    %c0_i32_260 = arith.constant 0 : i32
    %330 = tpu.memref_slice %arg2[%c26_i32, %c0_i32_259, %c0_i32_260] : memref<30x8x128xf32, #tpu.memory_space<vmem>> -> memref<1x8x128xf32, #tpu.memory_space<vmem>>
    %331 = tpu.memref_squeeze %330 : memref<1x8x128xf32, #tpu.memory_space<vmem>> -> memref<8x128xf32, #tpu.memory_space<vmem>>
    %c0_261 = arith.constant 0 : index
    %c0_262 = arith.constant 0 : index
    %332 = vector.load %331[%c0_261, %c0_262] : memref<8x128xf32, #tpu.memory_space<vmem>>, vector<8x128xf32>
    %c26_i32_263 = arith.constant 26 : i32
    %c0_i32_264 = arith.constant 0 : i32
    %c0_i32_265 = arith.constant 0 : i32
    %333 = tpu.memref_slice %arg3[%c26_i32_263, %c0_i32_264, %c0_i32_265] : memref<30x8x128xf32, #tpu.memory_space<vmem>> -> memref<1x8x128xf32, #tpu.memory_space<vmem>>
    %334 = tpu.memref_squeeze %333 : memref<1x8x128xf32, #tpu.memory_space<vmem>> -> memref<8x128xf32, #tpu.memory_space<vmem>>
    %c0_266 = arith.constant 0 : index
    %c0_267 = arith.constant 0 : index
    %335 = vector.load %334[%c0_266, %c0_267] : memref<8x128xf32, #tpu.memory_space<vmem>>, vector<8x128xf32>
    %336 = arith.subf %332, %335 : vector<8x128xf32>
    %337 = arith.mulf %336, %336 : vector<8x128xf32>
    %338 = arith.addf %329, %337 : vector<8x128xf32>
    %c27_i32 = arith.constant 27 : i32
    %c0_i32_268 = arith.constant 0 : i32
    %c0_i32_269 = arith.constant 0 : i32
    %339 = tpu.memref_slice %arg2[%c27_i32, %c0_i32_268, %c0_i32_269] : memref<30x8x128xf32, #tpu.memory_space<vmem>> -> memref<1x8x128xf32, #tpu.memory_space<vmem>>
    %340 = tpu.memref_squeeze %339 : memref<1x8x128xf32, #tpu.memory_space<vmem>> -> memref<8x128xf32, #tpu.memory_space<vmem>>
    %c0_270 = arith.constant 0 : index
    %c0_271 = arith.constant 0 : index
    %341 = vector.load %340[%c0_270, %c0_271] : memref<8x128xf32, #tpu.memory_space<vmem>>, vector<8x128xf32>
    %c27_i32_272 = arith.constant 27 : i32
    %c0_i32_273 = arith.constant 0 : i32
    %c0_i32_274 = arith.constant 0 : i32
    %342 = tpu.memref_slice %arg3[%c27_i32_272, %c0_i32_273, %c0_i32_274] : memref<30x8x128xf32, #tpu.memory_space<vmem>> -> memref<1x8x128xf32, #tpu.memory_space<vmem>>
    %343 = tpu.memref_squeeze %342 : memref<1x8x128xf32, #tpu.memory_space<vmem>> -> memref<8x128xf32, #tpu.memory_space<vmem>>
    %c0_275 = arith.constant 0 : index
    %c0_276 = arith.constant 0 : index
    %344 = vector.load %343[%c0_275, %c0_276] : memref<8x128xf32, #tpu.memory_space<vmem>>, vector<8x128xf32>
    %345 = arith.subf %341, %344 : vector<8x128xf32>
    %346 = arith.mulf %345, %345 : vector<8x128xf32>
    %347 = arith.addf %338, %346 : vector<8x128xf32>
    %c28_i32 = arith.constant 28 : i32
    %c0_i32_277 = arith.constant 0 : i32
    %c0_i32_278 = arith.constant 0 : i32
    %348 = tpu.memref_slice %arg2[%c28_i32, %c0_i32_277, %c0_i32_278] : memref<30x8x128xf32, #tpu.memory_space<vmem>> -> memref<1x8x128xf32, #tpu.memory_space<vmem>>
    %349 = tpu.memref_squeeze %348 : memref<1x8x128xf32, #tpu.memory_space<vmem>> -> memref<8x128xf32, #tpu.memory_space<vmem>>
    %c0_279 = arith.constant 0 : index
    %c0_280 = arith.constant 0 : index
    %350 = vector.load %349[%c0_279, %c0_280] : memref<8x128xf32, #tpu.memory_space<vmem>>, vector<8x128xf32>
    %c28_i32_281 = arith.constant 28 : i32
    %c0_i32_282 = arith.constant 0 : i32
    %c0_i32_283 = arith.constant 0 : i32
    %351 = tpu.memref_slice %arg3[%c28_i32_281, %c0_i32_282, %c0_i32_283] : memref<30x8x128xf32, #tpu.memory_space<vmem>> -> memref<1x8x128xf32, #tpu.memory_space<vmem>>
    %352 = tpu.memref_squeeze %351 : memref<1x8x128xf32, #tpu.memory_space<vmem>> -> memref<8x128xf32, #tpu.memory_space<vmem>>
    %c0_284 = arith.constant 0 : index
    %c0_285 = arith.constant 0 : index
    %353 = vector.load %352[%c0_284, %c0_285] : memref<8x128xf32, #tpu.memory_space<vmem>>, vector<8x128xf32>
    %354 = arith.subf %350, %353 : vector<8x128xf32>
    %355 = arith.mulf %354, %354 : vector<8x128xf32>
    %356 = arith.addf %347, %355 : vector<8x128xf32>
    %c29_i32 = arith.constant 29 : i32
    %c0_i32_286 = arith.constant 0 : i32
    %c0_i32_287 = arith.constant 0 : i32
    %357 = tpu.memref_slice %arg2[%c29_i32, %c0_i32_286, %c0_i32_287] : memref<30x8x128xf32, #tpu.memory_space<vmem>> -> memref<1x8x128xf32, #tpu.memory_space<vmem>>
    %358 = tpu.memref_squeeze %357 : memref<1x8x128xf32, #tpu.memory_space<vmem>> -> memref<8x128xf32, #tpu.memory_space<vmem>>
    %c0_288 = arith.constant 0 : index
    %c0_289 = arith.constant 0 : index
    %359 = vector.load %358[%c0_288, %c0_289] : memref<8x128xf32, #tpu.memory_space<vmem>>, vector<8x128xf32>
    %c29_i32_290 = arith.constant 29 : i32
    %c0_i32_291 = arith.constant 0 : i32
    %c0_i32_292 = arith.constant 0 : i32
    %360 = tpu.memref_slice %arg3[%c29_i32_290, %c0_i32_291, %c0_i32_292] : memref<30x8x128xf32, #tpu.memory_space<vmem>> -> memref<1x8x128xf32, #tpu.memory_space<vmem>>
    %361 = tpu.memref_squeeze %360 : memref<1x8x128xf32, #tpu.memory_space<vmem>> -> memref<8x128xf32, #tpu.memory_space<vmem>>
    %c0_293 = arith.constant 0 : index
    %c0_294 = arith.constant 0 : index
    %362 = vector.load %361[%c0_293, %c0_294] : memref<8x128xf32, #tpu.memory_space<vmem>>, vector<8x128xf32>
    %363 = arith.subf %359, %362 : vector<8x128xf32>
    %364 = arith.mulf %363, %363 : vector<8x128xf32>
    %365 = arith.addf %356, %364 : vector<8x128xf32>
    %cst_295 = arith.constant 5.000000e+00 : f32
    %366 = vector.broadcast %cst_295 : f32 to vector<8x128xf32>
    %367 = arith.mulf %366, %179 : vector<8x128xf32>
    %cst_296 = arith.constant 2.000000e+00 : f32
    %368 = vector.broadcast %cst_296 : f32 to vector<8x128xf32>
    %369 = arith.mulf %368, %155 : vector<8x128xf32>
    %370 = arith.addf %367, %369 : vector<8x128xf32>
    %371 = arith.addf %370, %156 : vector<8x128xf32>
    %372 = arith.addf %371, %365 : vector<8x128xf32>
    %373 = arith.mulf %68, %372 : vector<8x128xf32>
    %cst_297 = arith.constant 5.000000e-01 : f32
    %374 = vector.broadcast %cst_297 : f32 to vector<8x128xf32>
    %375 = arith.mulf %374, %70 : vector<8x128xf32>
    %376 = arith.mulf %375, %184 : vector<8x128xf32>
    %377 = arith.addf %373, %376 : vector<8x128xf32>
    %c0_298 = arith.constant 0 : index
    %c0_299 = arith.constant 0 : index
    %c0_300 = arith.constant 0 : index
    %378 = vector.load %arg4[%c0_298, %c0_299, %c0_300] : memref<1x8x128xf32, #tpu.memory_space<vmem>>, vector<1x8x128xf32>
    %379 = vector.shape_cast %377 : vector<8x128xf32> to vector<1x8x128xf32>
    %380 = arith.addf %378, %379 : vector<1x8x128xf32>
    %c0_301 = arith.constant 0 : index
    %c0_302 = arith.constant 0 : index
    %c0_303 = arith.constant 0 : index
    %381 = vector.load %arg4[%c0_301, %c0_302, %c0_303] : memref<1x8x128xf32, #tpu.memory_space<vmem>>, vector<1x8x128xf32>
    tpu.vector_store %arg4[%c0_301, %c0_302, %c0_303], %380 {strides = array<i32>} : memref<1x8x128xf32, #tpu.memory_space<vmem>>, vector<1x8x128xf32>,
    return
  }
  func.func @transform_0(%arg0: i32, %arg1: i32) -> (i32, i32, i32) {
    %c1_i32 = arith.constant 1 : i32
    %0 = arith.muli %arg0, %c1_i32 : i32
    %1 = arith.addi %0, %arg1 : i32
    %c0_i32 = arith.constant 0 : i32
    %c0_i32_0 = arith.constant 0 : i32
    %c0_i32_1 = arith.constant 0 : i32
    return %c0_i32, %1, %c0_i32_0 : i32, i32, i32
  }
  func.func @transform_1(%arg0: i32, %arg1: i32) -> (i32, i32, i32) {
    %c1_i32 = arith.constant 1 : i32
    %0 = arith.muli %arg0, %c1_i32 : i32
    %1 = arith.addi %0, %arg1 : i32
    %c0_i32 = arith.constant 0 : i32
    %c0_i32_0 = arith.constant 0 : i32
    %c0_i32_1 = arith.constant 0 : i32
    return %c0_i32, %1, %c0_i32_0 : i32, i32, i32
  }
  func.func @transform_2(%arg0: i32, %arg1: i32) -> (i32, i32, i32) {
    %c0_i32 = arith.constant 0 : i32
    %c0_i32_0 = arith.constant 0 : i32
    %c0_i32_1 = arith.constant 0 : i32
    return %arg0, %c0_i32, %c0_i32_0 : i32, i32, i32
  }
}

</mosaic_0001>

<llo_original>
// kernel: tpu_custom_call.1
$region0: #{tpu_custom_call.1}
  #allocation0 [shape = 'u32[]', space=smem, size = 0x4, offset = 0x4, fixed_abs, tag = 'smem constant byte address 0x4 - core index']
  #allocation1 [shape = 'u32[144,128]{1,0:T(1,128)}', space=vmem, size = 0x12000, scoped, tag = 'internal scratch']
  %s0 = inlined_call_operand.hbm [shape: f32[30,16,128], index: 0, kind: input, shape index: {}]
  %s1 = inlined_call_operand.hbm [shape: f32[30,16,128], index: 1, kind: input, shape index: {}]
  %s2 = inlined_call_operand.hbm [shape: f32[2,8,128], index: 2, kind: output, shape index: {}]
  %s3 = sld [smem:[#allocation0]]
  $region53: #{tpu_custom_call.1} parent=0
    _
  %s5 = ssub.s32 1, %s3
  %s6 = scalar_select 0, %s5, %s3
  $region1: #{tpu_custom_call.1} parent=0
    #allocation2 [shape = 'u8[245760]{0}', space=vmem, size = 0x3c000, scoped, tag = 'input window, operand 0']
    #allocation3 [shape = 's32[2]{0}', space=sflag, size = 0x8, scoped, tag = 'scoped memory for tpu_custom_call.1']
    #allocation4 [shape = 's32[2]{0}', space=sflag, size = 0x8, scoped, tag = 'scoped memory for tpu_custom_call.1']
    #allocation5 [shape = 'u8[245760]{0}', space=vmem, size = 0x3c000, scoped, tag = 'input window, operand 1']
    #allocation6 [shape = 's32[2]{0}', space=sflag, size = 0x8, scoped, tag = 'scoped memory for tpu_custom_call.1']
    #allocation7 [shape = 'u8[8192]{0}', space=vmem, size = 0x2000, scoped, tag = 'output window, operand 0']
    %7 = vsyncpa [#allocation3], 0
    %s8 = scalar_lea.sflag [#allocation3], 1
    %9 = vsyncpa %s8, 0
    %10 = vsyncpa [#allocation6], 0
    %s11 = scalar_lea.sflag [#allocation6], 1
    %12 = vsyncpa %s11, 0
    %13 = vsyncpa [#allocation4], 0
    %s14 = scalar_lea.sflag [#allocation4], 1
    %15 = vsyncpa %s14, 0
    loop: start=0, step=1, limit=4
    $region2: #{tpu_custom_call.1} parent=1 // loop_pre_header
      _
    $region3: #{tpu_custom_call.1} parent=1 // loop_header
      %s17 = sphi 0, %s21
      %p18 = scmp.ge.s32.totalorder %s17, 4
      %s24 = sphi 0, %s36
      %s25 = sphi 0, %s32
      %s26 = sphi 0, %s24
      %s27 = sphi 0, %s25
      %s28 = sphi 0, %s26
      %s29 = sphi 0, %s27
      %s41 = sphi 0, %s43
      %s44 = sphi 0, %s41
      %s45 = sphi 0, %s44
      %s61 = sphi 0, %s45
      %s69 = sphi 0, %s71
      %s72 = sphi 0, %s69
      %s73 = sphi 0, %s72
      %s89 = sphi 0, %s73
      %s95 = sphi 0, %s97
      %s98 = sphi 0, %s95
      %s99 = sphi 0, %s98
      %s115 = sphi 0, %s99
    $region4: #{tpu_custom_call.1} parent=1 // loop_header_branch
      %20 = sbr.rel (%p18) target = $region8
    $region5: #{tpu_custom_call.1} parent=1 // loop_body
      %s22 = ssub.s32 %s17, 1
      %s23 = ssub.s32 %s17, 2
      %s30 = sadd.s32 1, %s25
      %p31 = scmp.ge.s32.totalorder %s30, 1
      %s32 = scalar_select %p31, 0, %s30
      %s33 = sadd.s32 1, %s24
      %s34 = scalar_select %p31, %s33, %s24
      %p35 = scmp.ge.s32.totalorder %s34, 2
      %s36 = scalar_select %p35, 0, %s34
      %s37 = sadd.s32 %s24, %s25
      %s38 = sadd.s32 %s36, %s32
      %s39 = ssub.s32 %s37, %s38
      %p40 = scmp.eq.s32.totalorder %s39, 0
      %s42 = sadd.s32 %s41, 1
      %s43 = scalar_select %p40, %s41, %s42
      %p46 = pneg %p40
      %p47 = scmp.eq.s32.totalorder %s17, 1
      %p48 = por %p46, %p47
      %p49 = scmp.ne.s32.totalorder %s41, %s44
      %p50 = scmp.eq.s32.totalorder %s17, 0
      %p51 = por %p49, %p50
      %p52 = scmp.ne.s32.totalorder %s41, %s44
      %p53 = scmp.eq.s32.totalorder %s22, 1
      %p54 = por %p52, %p53
      %p55 = scmp.ne.s32.totalorder %s44, %s45
      %p56 = scmp.eq.s32.totalorder %s22, 0
      %p57 = por %p55, %p56
      %p58 = scmp.ne.s32.totalorder %s44, %s45
      %p59 = scmp.eq.s32.totalorder %s23, 1
      %p60 = por %p58, %p59
      %p62 = scmp.ne.s32.totalorder %s45, %s61
      %p63 = scmp.eq.s32.totalorder %s23, 0
      %p64 = por %p62, %p63
      %s65 = sadd.s32 %s24, %s25
      %s66 = sadd.s32 %s36, %s32
      %s67 = ssub.s32 %s65, %s66
      %p68 = scmp.eq.s32.totalorder %s67, 0
      %s70 = sadd.s32 %s69, 1
      %s71 = scalar_select %p68, %s69, %s70
      %p74 = pneg %p68
      %p75 = scmp.eq.s32.totalorder %s17, 1
      %p76 = por %p74, %p75
      %p77 = scmp.ne.s32.totalorder %s69, %s72
      %p78 = scmp.eq.s32.totalorder %s17, 0
      %p79 = por %p77, %p78
      %p80 = scmp.ne.s32.totalorder %s69, %s72
      %p81 = scmp.eq.s32.totalorder %s22, 1
      %p82 = por %p80, %p81
      %p83 = scmp.ne.s32.totalorder %s72, %s73
      %p84 = scmp.eq.s32.totalorder %s22, 0
      %p85 = por %p83, %p84
      %p86 = scmp.ne.s32.totalorder %s72, %s73
      %p87 = scmp.eq.s32.totalorder %s23, 1
      %p88 = por %p86, %p87
      %p90 = scmp.ne.s32.totalorder %s73, %s89
      %p91 = scmp.eq.s32.totalorder %s23, 0
      %p92 = por %p90, %p91
      %s93 = ssub.s32 %s24, %s36
      %p94 = scmp.eq.s32.totalorder %s93, 0
      %s96 = sadd.s32 %s95, 1
      %s97 = scalar_select %p94, %s95, %s96
      %p100 = pneg %p94
      %p101 = scmp.eq.s32.totalorder %s17, 1
      %p102 = por %p100, %p101
      %p103 = scmp.ne.s32.totalorder %s95, %s98
      %p104 = scmp.eq.s32.totalorder %s17, 0
      %p105 = por %p103, %p104
      %p106 = scmp.ne.s32.totalorder %s95, %s98
      %p107 = scmp.eq.s32.totalorder %s22, 1
      %p108 = por %p106, %p107
      %p109 = scmp.ne.s32.totalorder %s98, %s99
      %p110 = scmp.eq.s32.totalorder %s22, 0
      %p111 = por %p109, %p110
      %p112 = scmp.ne.s32.totalorder %s98, %s99
      %p113 = scmp.eq.s32.totalorder %s23, 1
      %p114 = por %p112, %p113
      %p116 = scmp.ne.s32.totalorder %s99, %s115
      %p117 = scmp.eq.s32.totalorder %s23, 0
      %p118 = por %p116, %p117
      %p119 = scmp.le.s32.totalorder 1, %s17
      %p120 = scmp.lt.s32.totalorder %s17, 3
      %p121 = pnand %p119, %p120
      %p122 = pneg %p121
      // Predicated region
      $region9: #{tpu_custom_call.1} parent=5 // pred_check
        _
      $region10: #{tpu_custom_call.1} parent=5 // pred_check_branch
        %124 = sbr.rel (%p121) target = $region12
      $region11: #{tpu_custom_call.1} parent=5 // pred_region
        %s125 = ssub.s32 %s17, 1
      $region12: #{tpu_custom_call.1} parent=5 // pred_fallthru
        _
      %p126 = scmp.lt.s32.totalorder %s17, 2
      // Predicated region
      $region13: #{tpu_custom_call.1} parent=5 // pred_check
        %p127 = pneg %p126
      $region14: #{tpu_custom_call.1} parent=5 // pred_check_branch
        %129 = sbr.rel (%p127) target = $region16
      $region15: #{tpu_custom_call.1} parent=5 // pred_region
        // Predicated region
        $region17: #{tpu_custom_call.1} parent=15 // pred_check
          %p130 = pneg %p51
        $region18: #{tpu_custom_call.1} parent=15 // pred_check_branch
          %132 = sbr.rel (%p130) target = $region20
        $region19: #{tpu_custom_call.1} parent=15 // pred_region
          %s133 = sand.u32 %s41, 1
          %s134 = scalar_lea.sflag [#allocation3], %s133
          %s135 = sand.u32 %s41, 1
          %s136 = smul.addr %s135, 240
          %s137 = scalar_lea.vmem [#allocation2], %s136
          %s138 = sadd.s32 %s24, %s25
          %s140 = ssub.s32 3840, 3840
          %141 = vsyncadd %s134, %s140
          %s142 = smul.addr %s138, 128
          %s143 = scalar_lea.hbm %s0, %s142
          %s144 = sshll.u32 %s137, 4
          %s145 = int_to_ptr.vmem [resolvable:$true] %s144
          %150 = dma.hbm_to_vmem [thread:$0]  %s143, 3840, %s145, %s134, 256, 128, 8
        $region20: #{tpu_custom_call.1} parent=15 // pred_fallthru
          _
        // Predicated region
        $region21: #{tpu_custom_call.1} parent=15 // pred_check
          %p151 = pneg %p79
        $region22: #{tpu_custom_call.1} parent=15 // pred_check_branch
          %153 = sbr.rel (%p151) target = $region24
        $region23: #{tpu_custom_call.1} parent=15 // pred_region
          %s154 = sand.u32 %s69, 1
          %s155 = scalar_lea.sflag [#allocation6], %s154
          %s156 = sand.u32 %s69, 1
          %s157 = smul.addr %s156, 240
          %s158 = scalar_lea.vmem [#allocation5], %s157
          %s159 = sadd.s32 %s24, %s25
          %s161 = ssub.s32 3840, 3840
          %162 = vsyncadd %s155, %s161
          %s163 = smul.addr %s159, 128
          %s164 = scalar_lea.hbm %s1, %s163
          %s165 = sshll.u32 %s158, 4
          %s166 = int_to_ptr.vmem [resolvable:$true] %s165
          %171 = dma.hbm_to_vmem [thread:$0]  %s164, 3840, %s166, %s155, 256, 128, 8
        $region24: #{tpu_custom_call.1} parent=15 // pred_fallthru
          _
      $region16: #{tpu_custom_call.1} parent=5 // pred_fallthru
        _
      %p172 = scmp.le.s32.totalorder 1, %s17
      %p173 = scmp.lt.s32.totalorder %s17, 3
      %p174 = pnand %p172, %p173
      %p175 = pneg %p174
      // Predicated region
      $region25: #{tpu_custom_call.1} parent=5 // pred_check
        _
      $region26: #{tpu_custom_call.1} parent=5 // pred_check_branch
        %177 = sbr.rel (%p174) target = $region28
      $region27: #{tpu_custom_call.1} parent=5 // pred_region
        %s178 = ssub.s32 %s17, 1
        %s179 = sand.u32 %s44, 1
        %s180 = scalar_lea.sflag [#allocation3], %s179
        %s181 = sand.u32 %s44, 1
        %s182 = smul.addr %s181, 240
        %s183 = scalar_lea.vmem [#allocation2], %s182
        // Predicated region
        $region29: #{tpu_custom_call.1} parent=27 // pred_check
          %p184 = pneg %p57
        $region30: #{tpu_custom_call.1} parent=27 // pred_check_branch
          %186 = sbr.rel (%p184) target = $region32
        $region31: #{tpu_custom_call.1} parent=27 // pred_region
          %187 = dma.done %s180, 3840
        $region32: #{tpu_custom_call.1} parent=27 // pred_fallthru
          _
        %s188 = sand.u32 %s72, 1
        %s189 = scalar_lea.sflag [#allocation6], %s188
        %s190 = sand.u32 %s72, 1
        %s191 = smul.addr %s190, 240
        %s192 = scalar_lea.vmem [#allocation5], %s191
        // Predicated region
        $region33: #{tpu_custom_call.1} parent=27 // pred_check
          %p193 = pneg %p85
        $region34: #{tpu_custom_call.1} parent=27 // pred_check_branch
          %195 = sbr.rel (%p193) target = $region36
        $region35: #{tpu_custom_call.1} parent=27 // pred_region
          %196 = dma.done %s189, 3840
        $region36: #{tpu_custom_call.1} parent=27 // pred_fallthru
          _
        %s197 = sand.u32 %s44, 1
        %s198 = scalar_lea.sflag [#allocation3], %s197
        %s199 = sand.u32 %s44, 1
        %s200 = smul.addr %s199, 240
        %s201 = scalar_lea.vmem [#allocation2], %s200
        %p202 = pneg %p57
        %p203 = pneg %p54
        %s204 = sand.u32 %s72, 1
        %s205 = scalar_lea.sflag [#allocation6], %s204
        %s206 = sand.u32 %s72, 1
        %s207 = smul.addr %s206, 240
        %s208 = scalar_lea.vmem [#allocation5], %s207
        %p209 = pneg %p85
        %p210 = pneg %p82
        %p211 = pneg %p111
        %p212 = pneg %p108
        %s213 = sand.u32 %s98, 1
        %s214 = scalar_lea.sflag [#allocation4], %s213
        %s215 = sand.u32 %s98, 1
        %s216 = smul.addr %s215, 8
        %s217 = scalar_lea.vmem [#allocation7], %s216
        %s218 = sadd.s32 %s26, %s27
        %s219 = sadd.s32 %s26, %s27
        %p220 = scmp.eq.s32.totalorder %s27, 0
        // Predicated region
        $region37: #{tpu_custom_call.1} parent=27 // pred_check
          %p221 = pneg %p220
        $region38: #{tpu_custom_call.1} parent=27 // pred_check_branch
          %223 = sbr.rel (%p221) target = $region40
        $region39: #{tpu_custom_call.1} parent=27 // pred_region
          %224 = vst [vmem:[%s217] sm:$0xff] 0.0
        $region40: #{tpu_custom_call.1} parent=27 // pred_fallthru
          _
        %v225 = vld [vmem:[%s183] sm:$0xff]
        %s226 = scalar_lea.vmem %s183, 8 [#allocation2]
        %v227 = vld [vmem:[%s226] sm:$0xff]
        %s228 = scalar_lea.vmem %s183, 16 [#allocation2]
        %v229 = vld [vmem:[%s228] sm:$0xff]
        %s230 = scalar_lea.vmem %s183, 24 [#allocation2]
        %v231 = vld [vmem:[%s230] sm:$0xff]
        %s232 = scalar_lea.vmem %s183, 32 [#allocation2]
        %v233 = vld [vmem:[%s232] sm:$0xff]
        %s234 = scalar_lea.vmem %s183, 40 [#allocation2]
        %v235 = vld [vmem:[%s234] sm:$0xff]
        %s236 = scalar_lea.vmem %s183, 48 [#allocation2]
        %v237 = vld [vmem:[%s236] sm:$0xff]
        %s238 = scalar_lea.vmem %s183, 56 [#allocation2]
        %v239 = vld [vmem:[%s238] sm:$0xff]
        %s240 = scalar_lea.vmem %s183, 64 [#allocation2]
        %v241 = vld [vmem:[%s240] sm:$0xff]
        %s242 = scalar_lea.vmem %s183, 72 [#allocation2]
        %v243 = vld [vmem:[%s242] sm:$0xff]
        %v244 = vld [vmem:[%s192] sm:$0xff]
        %s245 = scalar_lea.vmem %s192, 8 [#allocation5]
        %v246 = vld [vmem:[%s245] sm:$0xff]
        %s247 = scalar_lea.vmem %s192, 16 [#allocation5]
        %v248 = vld [vmem:[%s247] sm:$0xff]
        %s249 = scalar_lea.vmem %s192, 24 [#allocation5]
        %v250 = vld [vmem:[%s249] sm:$0xff]
        %s251 = scalar_lea.vmem %s192, 32 [#allocation5]
        %v252 = vld [vmem:[%s251] sm:$0xff]
        %s253 = scalar_lea.vmem %s192, 40 [#allocation5]
        %v254 = vld [vmem:[%s253] sm:$0xff]
        %s255 = scalar_lea.vmem %s192, 48 [#allocation5]
        %v256 = vld [vmem:[%s255] sm:$0xff]
        %s257 = scalar_lea.vmem %s192, 56 [#allocation5]
        %v258 = vld [vmem:[%s257] sm:$0xff]
        %s259 = scalar_lea.vmem %s192, 64 [#allocation5]
        %v260 = vld [vmem:[%s259] sm:$0xff]
        %s261 = scalar_lea.vmem %s192, 72 [#allocation5]
        %v262 = vld [vmem:[%s261] sm:$0xff]
        %vm263 = vcmp.gt.f32.partialorder %v252, 0.0
        %vm264 = vcmp.eq.f32.partialorder %v252, 0.0
        %v265 = vsel %vm263, 1, 0
        %v266 = vcvt.s32.f32 %v265
        %v267 = vsel %vm264, 1, 0
        %v268 = vcvt.s32.f32 %v267
        %v269 = vmul.f32 %v225, 0.071428575
        %v270 = vmul.f32 %v227, 0.071428575
        %v271 = vmul.f32 %v229, 0.5
        %v272 = vmul.f32 %v231, 0.5
        %v273 = vsub.f32 %v269, %v271
        %v274 = vsub.f32 %v270, %v272
        %v275 = vadd.f32 %v269, %v271
        %v276 = vadd.f32 %v270, %v272
        %v277 = vmul.f32 %v235, 0.071428575
        %v278 = vmul.f32 %v237, 0.071428575
        %v279 = vmul.f32 %v239, 0.5
        %v280 = vmul.f32 %v241, 0.5
        %v281 = vsub.f32 %v277, %v279
        %v282 = vsub.f32 %v278, %v280
        %v283 = vadd.f32 %v277, %v279
        %v284 = vadd.f32 %v278, %v280
        %v285 = vmul.f32 %v244, 0.071428575
        %v286 = vmul.f32 %v246, 0.071428575
        %v287 = vmul.f32 %v248, 0.5
        %v288 = vmul.f32 %v250, 0.5
        %v289 = vsub.f32 %v285, %v287
        %v290 = vsub.f32 %v286, %v288
        %v291 = vadd.f32 %v285, %v287
        %v292 = vadd.f32 %v286, %v288
        %v293 = vmul.f32 %v248, %v250
        %v294 = vmul.f32 %v229, %v231
        %v295 = vmin.f32 %v275, %v291
        %v296 = vmax.f32 %v273, %v289
        %v297 = vsub.f32 %v295, %v296
        %v298 = vmax.f32 %v297, 0.0
        %v299 = vmin.f32 %v276, %v292
        %v300 = vmax.f32 %v274, %v290
        %v301 = vsub.f32 %v299, %v300
        %v302 = vmax.f32 %v301, 0.0
        %v303 = vmul.f32 %v298, %v302
        %v304 = vadd.f32 %v294, %v293
        %v305 = vsub.f32 %v304, %v303
        %v306 = vsel %vm263, %v305, 1.0
        %v307 = vrcp.pop %v306
        %v308 = vmul.f32 %v303, %v307
        %v309 = vmul.f32 %v239, %v241
        %v310 = vmin.f32 %v283, %v291
        %v311 = vmax.f32 %v281, %v289
        %v312 = vsub.f32 %v310, %v311
        %v313 = vmax.f32 %v312, 0.0
        %v314 = vmin.f32 %v284, %v292
        %v315 = vmax.f32 %v282, %v290
        %v316 = vsub.f32 %v314, %v315
        %v317 = vmax.f32 %v316, 0.0
        %v318 = vmul.f32 %v313, %v317
        %v319 = vadd.f32 %v309, %v293
        %v320 = vsub.f32 %v319, %v318
        %v321 = vsel %vm263, %v320, 1.0
        %v322 = vrcp.pop %v321
        %v323 = vmul.f32 %v318, %v322
        %vm324 = vcmp.ge.f32.partialorder %v308, %v323
        %v325 = vmax.f32 %v308, %v323
        %v326 = vsel %vm324, %v225, %v235
        %v327 = vsel %vm324, %v227, %v237
        %v328 = vsel %vm324, %v229, %v239
        %v329 = vsel %vm324, %v231, %v241
        %v330 = vsel %vm324, %v233, %v243
        %v331 = vsel %vm324, %v243, %v233
        %v332 = vsel %vm324, %v244, %v254
        %v333 = vsel %vm324, %v246, %v256
        %v334 = vsel %vm324, %v248, %v258
        %v335 = vsel %vm324, %v250, %v260
        %v336 = vsub.f32 %v330, %v325
        %v337 = vmul.f32 %v336, %v336
        %v338 = vmul.f32 %v331, %v331
        %v339 = vsub.f32 %v326, %v332
        %v340 = vmul.f32 %v339, %v339
        %v341 = vsub.f32 %v327, %v333
        %v342 = vmul.f32 %v341, %v341
        %v343 = vadd.f32 %v340, %v342
        %v344 = vsel %vm263, %v328, 1.0
        %v345 = vrsqrt.pop %v344
        %v346 = vmul.f32 %v344, %v345
        %vm347 = vcmp.eq.f32.partialorder %v344, inf
        %v348 = vsel %vm347, %v344, %v346
        %vm349 = vcmp.eq.f32.partialorder %v344, 0.0
        %v350 = vand.u32 %v344, 2147483648
        %v351 = vsel %vm349, %v350, %v348
        %v352 = vsel %vm263, %v334, 1.0
        %v353 = vrsqrt.pop %v352
        %v354 = vmul.f32 %v352, %v353
        %vm355 = vcmp.eq.f32.partialorder %v352, inf
        %v356 = vsel %vm355, %v352, %v354
        %vm357 = vcmp.eq.f32.partialorder %v352, 0.0
        %v358 = vand.u32 %v352, 2147483648
        %v359 = vsel %vm357, %v358, %v356
        %v360 = vsub.f32 %v351, %v359
        %v361 = vmul.f32 %v360, %v360
        %v362 = vadd.f32 %v343, %v361
        %v363 = vsel %vm263, %v329, 1.0
        %v364 = vrsqrt.pop %v363
        %v365 = vmul.f32 %v363, %v364
        %vm366 = vcmp.eq.f32.partialorder %v363, inf
        %v367 = vsel %vm366, %v363, %v365
        %vm368 = vcmp.eq.f32.partialorder %v363, 0.0
        %v369 = vand.u32 %v363, 2147483648
        %v370 = vsel %vm368, %v369, %v367
        %v371 = vsel %vm263, %v335, 1.0
        %v372 = vrsqrt.pop %v371
        %v373 = vmul.f32 %v371, %v372
        %vm374 = vcmp.eq.f32.partialorder %v371, inf
        %v375 = vsel %vm374, %v371, %v373
        %vm376 = vcmp.eq.f32.partialorder %v371, 0.0
        %v377 = vand.u32 %v371, 2147483648
        %v378 = vsel %vm376, %v377, %v375
        %v379 = vsub.f32 %v370, %v378
        %v380 = vmul.f32 %v379, %v379
        %v381 = vadd.f32 %v362, %v380
        %v382 = vsub.f32 %v233, %v252
        %v383 = vsub.f32 %v243, %v262
        %v384 = vmul.f32 %v382, %v382
        %v385 = vmul.f32 %v383, %v383
        %v386 = vadd.f32 %v384, %v385
        %s387 = scalar_lea.vmem %s183, 80 [#allocation2]
        %v388 = vld [vmem:[%s387] sm:$0xff]
        %s389 = scalar_lea.vmem %s192, 80 [#allocation5]
        %v390 = vld [vmem:[%s389] sm:$0xff]
        %v391 = vsub.f32 %v388, %v390
        %v392 = vmul.f32 %v391, %v391
        %v393 = vadd.f32 %v392, 0.0
        %s394 = scalar_lea.vmem %s183, 88 [#allocation2]
        %v395 = vld [vmem:[%s394] sm:$0xff]
        %s396 = scalar_lea.vmem %s192, 88 [#allocation5]
        %v397 = vld [vmem:[%s396] sm:$0xff]
        %v398 = vsub.f32 %v395, %v397
        %v399 = vmul.f32 %v398, %v398
        %v400 = vadd.f32 %v393, %v399
        %s401 = scalar_lea.vmem %s183, 96 [#allocation2]
        %v402 = vld [vmem:[%s401] sm:$0xff]
        %s403 = scalar_lea.vmem %s192, 96 [#allocation5]
        %v404 = vld [vmem:[%s403] sm:$0xff]
        %v405 = vsub.f32 %v402, %v404
        %v406 = vmul.f32 %v405, %v405
        %v407 = vadd.f32 %v400, %v406
        %s408 = scalar_lea.vmem %s183, 104 [#allocation2]
        %v409 = vld [vmem:[%s408] sm:$0xff]
        %s410 = scalar_lea.vmem %s192, 104 [#allocation5]
        %v411 = vld [vmem:[%s410] sm:$0xff]
        %v412 = vsub.f32 %v409, %v411
        %v413 = vmul.f32 %v412, %v412
        %v414 = vadd.f32 %v407, %v413
        %s415 = scalar_lea.vmem %s183, 112 [#allocation2]
        %v416 = vld [vmem:[%s415] sm:$0xff]
        %s417 = scalar_lea.vmem %s192, 112 [#allocation5]
        %v418 = vld [vmem:[%s417] sm:$0xff]
        %v419 = vsub.f32 %v416, %v418
        %v420 = vmul.f32 %v419, %v419
        %v421 = vadd.f32 %v414, %v420
        %s422 = scalar_lea.vmem %s183, 120 [#allocation2]
        %v423 = vld [vmem:[%s422] sm:$0xff]
        %s424 = scalar_lea.vmem %s192, 120 [#allocation5]
        %v425 = vld [vmem:[%s424] sm:$0xff]
        %v426 = vsub.f32 %v423, %v425
        %v427 = vmul.f32 %v426, %v426
        %v428 = vadd.f32 %v421, %v427
        %s429 = scalar_lea.vmem %s183, 128 [#allocation2]
        %v430 = vld [vmem:[%s429] sm:$0xff]
        %s431 = scalar_lea.vmem %s192, 128 [#allocation5]
        %v432 = vld [vmem:[%s431] sm:$0xff]
        %v433 = vsub.f32 %v430, %v432
        %v434 = vmul.f32 %v433, %v433
        %v435 = vadd.f32 %v428, %v434
        %s436 = scalar_lea.vmem %s183, 136 [#allocation2]
        %v437 = vld [vmem:[%s436] sm:$0xff]
        %s438 = scalar_lea.vmem %s192, 136 [#allocation5]
        %v439 = vld [vmem:[%s438] sm:$0xff]
        %v440 = vsub.f32 %v437, %v439
        %v441 = vmul.f32 %v440, %v440
        %v442 = vadd.f32 %v435, %v441
        %s443 = scalar_lea.vmem %s183, 144 [#allocation2]
        %v444 = vld [vmem:[%s443] sm:$0xff]
        %s445 = scalar_lea.vmem %s192, 144 [#allocation5]
        %v446 = vld [vmem:[%s445] sm:$0xff]
        %v447 = vsub.f32 %v444, %v446
        %v448 = vmul.f32 %v447, %v447
        %v449 = vadd.f32 %v442, %v448
        %s450 = scalar_lea.vmem %s183, 152 [#allocation2]
        %v451 = vld [vmem:[%s450] sm:$0xff]
        %s452 = scalar_lea.vmem %s192, 152 [#allocation5]
        %v453 = vld [vmem:[%s452] sm:$0xff]
        %v454 = vsub.f32 %v451, %v453
        %v455 = vmul.f32 %v454, %v454
        %v456 = vadd.f32 %v449, %v455
        %s457 = scalar_lea.vmem %s183, 160 [#allocation2]
        %v458 = vld [vmem:[%s457] sm:$0xff]
        %s459 = scalar_lea.vmem %s192, 160 [#allocation5]
        %v460 = vld [vmem:[%s459] sm:$0xff]
        %v461 = vsub.f32 %v458, %v460
        %v462 = vmul.f32 %v461, %v461
        %v463 = vadd.f32 %v456, %v462
        %s464 = scalar_lea.vmem %s183, 168 [#allocation2]
        %v465 = vld [vmem:[%s464] sm:$0xff]
        %s466 = scalar_lea.vmem %s192, 168 [#allocation5]
        %v467 = vld [vmem:[%s466] sm:$0xff]
        %v468 = vsub.f32 %v465, %v467
        %v469 = vmul.f32 %v468, %v468
        %v470 = vadd.f32 %v463, %v469
        %s471 = scalar_lea.vmem %s183, 176 [#allocation2]
        %v472 = vld [vmem:[%s471] sm:$0xff]
        %s473 = scalar_lea.vmem %s192, 176 [#allocation5]
        %v474 = vld [vmem:[%s473] sm:$0xff]
        %v475 = vsub.f32 %v472, %v474
        %v476 = vmul.f32 %v475, %v475
        %v477 = vadd.f32 %v470, %v476
        %s478 = scalar_lea.vmem %s183, 184 [#allocation2]
        %v479 = vld [vmem:[%s478] sm:$0xff]
        %s480 = scalar_lea.vmem %s192, 184 [#allocation5]
        %v481 = vld [vmem:[%s480] sm:$0xff]
        %v482 = vsub.f32 %v479, %v481
        %v483 = vmul.f32 %v482, %v482
        %v484 = vadd.f32 %v477, %v483
        %s485 = scalar_lea.vmem %s183, 192 [#allocation2]
        %v486 = vld [vmem:[%s485] sm:$0xff]
        %s487 = scalar_lea.vmem %s192, 192 [#allocation5]
        %v488 = vld [vmem:[%s487] sm:$0xff]
        %v489 = vsub.f32 %v486, %v488
        %v490 = vmul.f32 %v489, %v489
        %v491 = vadd.f32 %v484, %v490
        %s492 = scalar_lea.vmem %s183, 200 [#allocation2]
        %v493 = vld [vmem:[%s492] sm:$0xff]
        %s494 = scalar_lea.vmem %s192, 200 [#allocation5]
        %v495 = vld [vmem:[%s494] sm:$0xff]
        %v496 = vsub.f32 %v493, %v495
        %v497 = vmul.f32 %v496, %v496
        %v498 = vadd.f32 %v491, %v497
        %s499 = scalar_lea.vmem %s183, 208 [#allocation2]
        %v500 = vld [vmem:[%s499] sm:$0xff]
        %s501 = scalar_lea.vmem %s192, 208 [#allocation5]
        %v502 = vld [vmem:[%s501] sm:$0xff]
        %v503 = vsub.f32 %v500, %v502
        %v504 = vmul.f32 %v503, %v503
        %v505 = vadd.f32 %v498, %v504
        %s506 = scalar_lea.vmem %s183, 216 [#allocation2]
        %v507 = vld [vmem:[%s506] sm:$0xff]
        %s508 = scalar_lea.vmem %s192, 216 [#allocation5]
        %v509 = vld [vmem:[%s508] sm:$0xff]
        %v510 = vsub.f32 %v507, %v509
        %v511 = vmul.f32 %v510, %v510
        %v512 = vadd.f32 %v505, %v511
        %s513 = scalar_lea.vmem %s183, 224 [#allocation2]
        %v514 = vld [vmem:[%s513] sm:$0xff]
        %s515 = scalar_lea.vmem %s192, 224 [#allocation5]
        %v516 = vld [vmem:[%s515] sm:$0xff]
        %v517 = vsub.f32 %v514, %v516
        %v518 = vmul.f32 %v517, %v517
        %v519 = vadd.f32 %v512, %v518
        %s520 = scalar_lea.vmem %s183, 232 [#allocation2]
        %v521 = vld [vmem:[%s520] sm:$0xff]
        %s522 = scalar_lea.vmem %s192, 232 [#allocation5]
        %v523 = vld [vmem:[%s522] sm:$0xff]
        %v524 = vsub.f32 %v521, %v523
        %v525 = vmul.f32 %v524, %v524
        %v526 = vadd.f32 %v519, %v525
        %v527 = vmul.f32 %v381, 5.0
        %v528 = vmul.f32 %v337, 2.0
        %v529 = vadd.f32 %v527, %v528
        %v530 = vadd.f32 %v529, %v338
        %v531 = vadd.f32 %v530, %v526
        %v532 = vmul.f32 %v266, %v531
        %v533 = vmul.f32 %v268, 0.5
        %v534 = vmul.f32 %v533, %v386
        %v535 = vadd.f32 %v532, %v534
        %v536 = vld [vmem:[%s217] sm:$0xff]
        %v537 = vadd.f32 %v536, %v535
        %538 = vst [vmem:[%s217] sm:$0xff] %v537
        %s539 = sand.u32 %s98, 1
        %s540 = scalar_lea.sflag [#allocation4], %s539
        %s541 = sand.u32 %s98, 1
        %s542 = smul.addr %s541, 8
        %s543 = scalar_lea.vmem [#allocation7], %s542
        // Predicated region
        $region41: #{tpu_custom_call.1} parent=27 // pred_check
          %p544 = pneg %p108
        $region42: #{tpu_custom_call.1} parent=27 // pred_check_branch
          %546 = sbr.rel (%p544) target = $region44
        $region43: #{tpu_custom_call.1} parent=27 // pred_region
          %s548 = ssub.s32 128, 128
          %549 = vsyncadd %s540, %s548
          %s550 = smul.addr %s26, 128
          %s551 = scalar_lea.hbm %s2, %s550
          %s553 = sshll.u32 %s543, 4
          %s554 = int_to_ptr.vmem [resolvable:$true] %s553
          %556 = dma.vmem_to_hbm [thread:$0]  %s554, 128, %s551, %s540
        $region44: #{tpu_custom_call.1} parent=27 // pred_fallthru
          _
      $region28: #{tpu_custom_call.1} parent=5 // pred_fallthru
        _
      %p557 = scmp.le.s32.totalorder 2, %s17
      // Predicated region
      $region45: #{tpu_custom_call.1} parent=5 // pred_check
        %p558 = pneg %p557
      $region46: #{tpu_custom_call.1} parent=5 // pred_check_branch
        %560 = sbr.rel (%p558) target = $region48
      $region47: #{tpu_custom_call.1} parent=5 // pred_region
        %s561 = ssub.s32 %s17, 2
        // Predicated region
        $region49: #{tpu_custom_call.1} parent=47 // pred_check
          %p562 = pneg %p114
        $region50: #{tpu_custom_call.1} parent=47 // pred_check_branch
          %564 = sbr.rel (%p562) target = $region52
        $region51: #{tpu_custom_call.1} parent=47 // pred_region
          %s565 = sand.u32 %s99, 1
          %s566 = scalar_lea.sflag [#allocation4], %s565
          %s567 = sand.u32 %s99, 1
          %s568 = smul.addr %s567, 8
          %s569 = scalar_lea.vmem [#allocation7], %s568
          %570 = dma.done %s566, 128
        $region52: #{tpu_custom_call.1} parent=47 // pred_fallthru
          _
      $region48: #{tpu_custom_call.1} parent=5 // pred_fallthru
        _
    $region6: #{tpu_custom_call.1} parent=1 // loop_footer
      %s21 = sadd.s32 1, %s17
    $region7: #{tpu_custom_call.1} parent=1 // loop_footer_branch
      %16 = sbr.rel target = $region3
    $region8: #{tpu_custom_call.1} parent=1 // loop_exit
      _
    %571 = vsyncpa [#allocation3], 1
    %s572 = scalar_lea.sflag [#allocation3], 1
    %573 = vsyncpa %s572, 1
    %574 = vsyncpa [#allocation6], 1
    %s575 = scalar_lea.sflag [#allocation6], 1
    %576 = vsyncpa %s575, 1
    %577 = vsyncpa [#allocation4], 1
    %s578 = scalar_lea.sflag [#allocation4], 1
    %579 = vsyncpa %s578, 1

</llo_original>
